<compile_context>
chip_gen: v6e
topology: v6e:2x2x1
jax: 0.10.0
libtpu: 0.0.40
codegen_flags: <defaults>
</compile_context>

<pallas_src>
import functools

import jax
import jax.numpy as jnp
from jax.experimental import pallas as pl
from jax.experimental.pallas import tpu as pltpu


def _gcn_kernel(x_ref, at_ref, w_ref, b_ref, o_ref, *, support_len, order, c_in):
    """Process one lane-block of TB columns of B = N*L.

    x_ref : (C_in, V, TB)      lanes = TB (per-channel node-major tiles)
    at_ref: (S, V, V)          at_ref[s] = A_s^T
    w_ref : (C_out, C_total)   1x1-conv weight
    b_ref : (C_out, 1)         1x1-conv bias
    o_ref : (C_out, V, TB)     lanes = TB
    """
    x = x_ref[...]
    v_nodes = x.shape[1]
    tb = x.shape[2]
    in_dtype = x.dtype

    # Batch all input channels onto the lane axis: (V, C_in*TB), columns
    # ordered (c, b).  When TB is a multiple of 128 (or the full B) this is a
    # vreg-level concat with no intra-vreg data movement.
    xb = jnp.concatenate([x[c] for c in range(c_in)], axis=-1)

    # Graph propagation: ONE MXU matmul per (support, hop): K=V, N=C_in*TB.
    # Hops are chained (and downcast per hop) to match PyTorch numerics.
    group_tiles = [xb]
    for s in range(support_len):
        a_t = at_ref[s]                                    # (V, V) = A_s^T
        cur = xb
        for _ in range(order):
            cur = jnp.dot(a_t, cur,
                          preferred_element_type=jnp.float32).astype(in_dtype)
            group_tiles.append(cur)

    # Assemble h in PyTorch concat order: channel ct = g*c_in + c.
    # Leading-axis stack is cheap; the reshape to (C_total, V*TB) is the one
    # VMEM-local relayout needed to put the conv contraction on sublanes.
    chan_tiles = []
    for g in group_tiles:
        for c in range(c_in):
            chan_tiles.append(g[:, c * tb:(c + 1) * tb])   # (V, TB)
    c_total = len(chan_tiles)
    h = jnp.stack(chan_tiles, axis=0)                      # (C_total, V, TB)
    h2 = h.reshape(c_total, v_nodes * tb)                  # (C_total, V*TB)

    # Fused 1x1 conv: ONE matmul (K=C_total, N=V*TB), f32 accumulation,
    # single bias broadcast.
    out = jnp.dot(w_ref[...], h2, preferred_element_type=jnp.float32)
    out = out + b_ref[...]                                 # (C_out, V*TB)

    # TODO(synk): training-mode dropout would need pltpu.prng_seed /
    # prng_random_bits; eval-mode (identity) here.
    o_ref[...] = out.reshape(o_ref.shape).astype(o_ref.dtype)


def _choose_block_b(B, block_b):
    """Pick the lane-tile size: a multiple of 128 dividing B when possible."""
    if B <= block_b:
        # Split into 2 steps when B is large enough so a v7x 'parallel' grid
        # axis can occupy both TensorCores.
        if B >= 512 and B % 256 == 0:
            return B // 2
        return B
    t = (block_b // 128) * 128
    while t >= 128:
        if B % t == 0:
            return t
        t -= 128
    return B  # fall back to a single full-width block (always legal)


def gcn_forward(x, supports, weight, bias, *, order=2, block_b=512):
    """x: (N, C_in, V, L), supports: (S, V, V), weight: (C_out, C_total), bias: (C_out,)."""
    N, c_in, V, L = x.shape
    S = supports.shape[0]
    c_out, c_total = weight.shape
    assert c_total == (order * S + 1) * c_in, (c_total, order, S, c_in)

    B = N * L
    tb = _choose_block_b(B, block_b)
    assert B % tb == 0, (B, tb)

    # (N, C_in, V, L) -> (C_in, V, N, L) -> (C_in, V, B): big dim B on lanes.
    x_t = jnp.transpose(x, (1, 2, 0, 3)).reshape(c_in, V, B)
    a_t = jnp.swapaxes(supports, 1, 2)                     # a_t[s] = A_s^T
    b_t = bias.reshape(c_out, 1)

    # Per-step VMEM footprint estimate (double-buffered in/out blocks, group
    # tiles, h, f32 conv result); request that (with slack) instead of the
    # whole VMEM (v7x only has 64 MiB physical per TensorCore).
    isz = x.dtype.itemsize
    est = (2 * c_in * V * tb * isz            # x block, double buffered
           + 2 * c_out * V * tb * isz         # out block, double buffered
           + 3 * c_total * V * tb * isz       # group tiles + h + h2
           + 2 * c_out * V * tb * 4           # f32 conv result
           + (S * V * V + c_out * c_total + c_out) * 4)
    vmem_limit = min(max(int(est * 1.5) + (2 << 20), 16 << 20), 48 << 20)

    kernel = functools.partial(_gcn_kernel, support_len=S, order=order, c_in=c_in)

    out = pl.pallas_call(
        kernel,
        out_shape=jax.ShapeDtypeStruct((c_out, V, B), x.dtype),
        grid_spec=pltpu.PrefetchScalarGridSpec(
            num_scalar_prefetch=0,
            grid=(B // tb,),
            in_specs=[
                pl.BlockSpec((c_in, V, tb), lambda i: (0, 0, i)),
                pl.BlockSpec((S, V, V), lambda i: (0, 0, 0)),
                pl.BlockSpec((c_out, c_total), lambda i: (0, 0)),
                pl.BlockSpec((c_out, 1), lambda i: (0, 0)),
            ],
            out_specs=pl.BlockSpec((c_out, V, tb), lambda i: (0, 0, i)),
        ),
        compiler_params=pltpu.CompilerParams(
            dimension_semantics=("parallel",),
            vmem_limit_bytes=vmem_limit,
        ),
    )(x_t, a_t, weight, b_t)

    # (C_out, V, B) -> (C_out, V, N, L) -> (N, C_out, V, L)
    return out.reshape(c_out, V, N, L).transpose(2, 0, 1, 3)


def gcn_reference(x, supports, weight, bias, *, order=2):
    """Pure-JAX reference matching the PyTorch forward (dropout in eval mode)."""
    hp = jax.lax.Precision.HIGHEST
    out = [x]
    for s in range(supports.shape[0]):
        a = supports[s]
        x1 = jnp.einsum("ncvl,vw->ncwl", x, a, precision=hp)
        out.append(x1)
        for _ in range(2, order + 1):
            x2 = jnp.einsum("ncvl,vw->ncwl", x1, a, precision=hp)
            out.append(x2)
            x1 = x2
    h = jnp.concatenate(out, axis=1)
    h = jnp.einsum("ncvl,oc->novl", h, weight, precision=hp)
    return h + bias[None, :, None, None]


if __name__ == "__main__":
    # Small shapes consistent with the module: batch N=2, c_in=4, nodes V=16,
    # seq L=8, support_len=3, order=2, c_out=32  ->  c_total = (2*3+1)*4 = 28.
    N, C_IN, V, L = 2, 4, 16, 8
    SUPPORT_LEN, ORDER, C_OUT = 3, 2, 32
    C_TOTAL = (ORDER * SUPPORT_LEN + 1) * C_IN

    key = jax.random.PRNGKey(0)
    kx, ka, kw, kb = jax.random.split(key, 4)

    x = jax.random.normal(kx, (N, C_IN, V, L), dtype=jnp.float32)
    supports = jax.nn.softmax(
        jax.random.normal(ka, (SUPPORT_LEN, V, V), dtype=jnp.float32), axis=-1
    )
    weight = jax.random.normal(kw, (C_OUT, C_TOTAL), dtype=jnp.float32) * 0.1
    bias = jax.random.normal(kb, (C_OUT,), dtype=jnp.float32) * 0.1

    out = gcn_forward(x, supports, weight, bias, order=ORDER)
    out = jax.block_until_ready(out)

    ref = gcn_reference(x, supports, weight, bias, order=ORDER)
    assert out.shape == (N, C_OUT, V, L), out.shape
    assert jnp.allclose(out, ref, atol=1e-4, rtol=1e-4), (
        float(jnp.max(jnp.abs(out - ref)))
    )
    print("KERNEL_OK")
</pallas_src>

<mosaic_0001>
module attributes {stable_mosaic.version = 11 : i64} {
  func.func @_gcn_kernel(%arg0: i32, %arg1: memref<4x16x16xf32, #tpu.memory_space<vmem>>, %arg2: memref<3x16x16xf32, #tpu.memory_space<vmem>>, %arg3: memref<32x28xf32, #tpu.memory_space<vmem>>, %arg4: memref<32x1xf32, #tpu.memory_space<vmem>>, %arg5: memref<32x16x16xf32, #tpu.memory_space<vmem>>) attributes {dimension_semantics = [#tpu.dimension_semantics<parallel>], iteration_bounds = array<i64: 1>, scalar_prefetch = 0 : i64, scratch_operands = 0 : i64, tpu.core_type = #tpu.core_type<tc>, window_params = [{transform_indices = @transform_0, window_bounds = array<i64: 4, 16, 16>}, {pipeline_mode = #tpu.pipeline_mode<synchronous>, transform_indices = @transform_1, window_bounds = array<i64: 3, 16, 16>}, {pipeline_mode = #tpu.pipeline_mode<synchronous>, transform_indices = @transform_2, window_bounds = array<i64: 32, 28>}, {pipeline_mode = #tpu.pipeline_mode<synchronous>, transform_indices = @transform_3, window_bounds = array<i64: 32, 1>}, {transform_indices = @transform_4, window_bounds = array<i64: 32, 16, 16>}]} {
    %c0 = arith.constant 0 : index
    %c0_0 = arith.constant 0 : index
    %c0_1 = arith.constant 0 : index
    %0 = vector.load %arg1[%c0, %c0_0, %c0_1] : memref<4x16x16xf32, #tpu.memory_space<vmem>>, vector<4x16x16xf32>
    %1 = vector.extract_strided_slice %0 {offsets = [0, 0, 0], sizes = [1, 16, 16], strides = [1, 1, 1]} : vector<4x16x16xf32> to vector<1x16x16xf32>
    %2 = vector.shape_cast %1 : vector<1x16x16xf32> to vector<16x16xf32>
    %3 = vector.extract_strided_slice %0 {offsets = [1, 0, 0], sizes = [1, 16, 16], strides = [1, 1, 1]} : vector<4x16x16xf32> to vector<1x16x16xf32>
    %4 = vector.shape_cast %3 : vector<1x16x16xf32> to vector<16x16xf32>
    %5 = vector.extract_strided_slice %0 {offsets = [2, 0, 0], sizes = [1, 16, 16], strides = [1, 1, 1]} : vector<4x16x16xf32> to vector<1x16x16xf32>
    %6 = vector.shape_cast %5 : vector<1x16x16xf32> to vector<16x16xf32>
    %7 = vector.extract_strided_slice %0 {offsets = [3, 0, 0], sizes = [1, 16, 16], strides = [1, 1, 1]} : vector<4x16x16xf32> to vector<1x16x16xf32>
    %8 = vector.shape_cast %7 : vector<1x16x16xf32> to vector<16x16xf32>
    %9 = tpu.concatenate %2, %4, %6, %8 in 1 : vector<16x16xf32>, vector<16x16xf32>, vector<16x16xf32>, vector<16x16xf32> -> vector<16x64xf32>
    %c0_2 = arith.constant 0 : index
    %c0_3 = arith.constant 0 : index
    %c0_4 = arith.constant 0 : index
    %10 = vector.load %arg2[%c0_2, %c0_3, %c0_4] : memref<3x16x16xf32, #tpu.memory_space<vmem>>, vector<1x16x16xf32>
    %11 = vector.shape_cast %10 : vector<1x16x16xf32> to vector<16x16xf32>
    %cst = arith.constant dense<0.000000e+00> : vector<16x64xf32>
    %12 = tpu.matmul %11, %9, %cst {dimension_numbers = #tpu.dot_dimension_numbers<[1], [0], [0], [1], [0, 0, 1, 1], [], []>} : vector<16x16xf32>, vector<16x64xf32>, vector<16x64xf32> -> vector<16x64xf32>
    %cst_5 = arith.constant dense<0.000000e+00> : vector<16x64xf32>
    %13 = tpu.matmul %11, %12, %cst_5 {dimension_numbers = #tpu.dot_dimension_numbers<[1], [0], [0], [1], [0, 0, 1, 1], [], []>} : vector<16x16xf32>, vector<16x64xf32>, vector<16x64xf32> -> vector<16x64xf32>
    %c1 = arith.constant 1 : index
    %c0_6 = arith.constant 0 : index
    %c0_7 = arith.constant 0 : index
    %14 = vector.load %arg2[%c1, %c0_6, %c0_7] : memref<3x16x16xf32, #tpu.memory_space<vmem>>, vector<1x16x16xf32>
    %15 = vector.shape_cast %14 : vector<1x16x16xf32> to vector<16x16xf32>
    %cst_8 = arith.constant dense<0.000000e+00> : vector<16x64xf32>
    %16 = tpu.matmul %15, %9, %cst_8 {dimension_numbers = #tpu.dot_dimension_numbers<[1], [0], [0], [1], [0, 0, 1, 1], [], []>} : vector<16x16xf32>, vector<16x64xf32>, vector<16x64xf32> -> vector<16x64xf32>
    %cst_9 = arith.constant dense<0.000000e+00> : vector<16x64xf32>
    %17 = tpu.matmul %15, %16, %cst_9 {dimension_numbers = #tpu.dot_dimension_numbers<[1], [0], [0], [1], [0, 0, 1, 1], [], []>} : vector<16x16xf32>, vector<16x64xf32>, vector<16x64xf32> -> vector<16x64xf32>
    %c2 = arith.constant 2 : index
    %c0_10 = arith.constant 0 : index
    %c0_11 = arith.constant 0 : index
    %18 = vector.load %arg2[%c2, %c0_10, %c0_11] : memref<3x16x16xf32, #tpu.memory_space<vmem>>, vector<1x16x16xf32>
    %19 = vector.shape_cast %18 : vector<1x16x16xf32> to vector<16x16xf32>
    %cst_12 = arith.constant dense<0.000000e+00> : vector<16x64xf32>
    %20 = tpu.matmul %19, %9, %cst_12 {dimension_numbers = #tpu.dot_dimension_numbers<[1], [0], [0], [1], [0, 0, 1, 1], [], []>} : vector<16x16xf32>, vector<16x64xf32>, vector<16x64xf32> -> vector<16x64xf32>
    %cst_13 = arith.constant dense<0.000000e+00> : vector<16x64xf32>
    %21 = tpu.matmul %19, %20, %cst_13 {dimension_numbers = #tpu.dot_dimension_numbers<[1], [0], [0], [1], [0, 0, 1, 1], [], []>} : vector<16x16xf32>, vector<16x64xf32>, vector<16x64xf32> -> vector<16x64xf32>
    %22 = vector.extract_strided_slice %9 {offsets = [0, 0], sizes = [16, 16], strides = [1, 1]} : vector<16x64xf32> to vector<16x16xf32>
    %23 = vector.extract_strided_slice %9 {offsets = [0, 16], sizes = [16, 16], strides = [1, 1]} : vector<16x64xf32> to vector<16x16xf32>
    %24 = vector.extract_strided_slice %9 {offsets = [0, 32], sizes = [16, 16], strides = [1, 1]} : vector<16x64xf32> to vector<16x16xf32>
    %25 = vector.extract_strided_slice %9 {offsets = [0, 48], sizes = [16, 16], strides = [1, 1]} : vector<16x64xf32> to vector<16x16xf32>
    %26 = vector.extract_strided_slice %12 {offsets = [0, 0], sizes = [16, 16], strides = [1, 1]} : vector<16x64xf32> to vector<16x16xf32>
    %27 = vector.extract_strided_slice %12 {offsets = [0, 16], sizes = [16, 16], strides = [1, 1]} : vector<16x64xf32> to vector<16x16xf32>
    %28 = vector.extract_strided_slice %12 {offsets = [0, 32], sizes = [16, 16], strides = [1, 1]} : vector<16x64xf32> to vector<16x16xf32>
    %29 = vector.extract_strided_slice %12 {offsets = [0, 48], sizes = [16, 16], strides = [1, 1]} : vector<16x64xf32> to vector<16x16xf32>
    %30 = vector.extract_strided_slice %13 {offsets = [0, 0], sizes = [16, 16], strides = [1, 1]} : vector<16x64xf32> to vector<16x16xf32>
    %31 = vector.extract_strided_slice %13 {offsets = [0, 16], sizes = [16, 16], strides = [1, 1]} : vector<16x64xf32> to vector<16x16xf32>
    %32 = vector.extract_strided_slice %13 {offsets = [0, 32], sizes = [16, 16], strides = [1, 1]} : vector<16x64xf32> to vector<16x16xf32>
    %33 = vector.extract_strided_slice %13 {offsets = [0, 48], sizes = [16, 16], strides = [1, 1]} : vector<16x64xf32> to vector<16x16xf32>
    %34 = vector.extract_strided_slice %16 {offsets = [0, 0], sizes = [16, 16], strides = [1, 1]} : vector<16x64xf32> to vector<16x16xf32>
    %35 = vector.extract_strided_slice %16 {offsets = [0, 16], sizes = [16, 16], strides = [1, 1]} : vector<16x64xf32> to vector<16x16xf32>
    %36 = vector.extract_strided_slice %16 {offsets = [0, 32], sizes = [16, 16], strides = [1, 1]} : vector<16x64xf32> to vector<16x16xf32>
    %37 = vector.extract_strided_slice %16 {offsets = [0, 48], sizes = [16, 16], strides = [1, 1]} : vector<16x64xf32> to vector<16x16xf32>
    %38 = vector.extract_strided_slice %17 {offsets = [0, 0], sizes = [16, 16], strides = [1, 1]} : vector<16x64xf32> to vector<16x16xf32>
    %39 = vector.extract_strided_slice %17 {offsets = [0, 16], sizes = [16, 16], strides = [1, 1]} : vector<16x64xf32> to vector<16x16xf32>
    %40 = vector.extract_strided_slice %17 {offsets = [0, 32], sizes = [16, 16], strides = [1, 1]} : vector<16x64xf32> to vector<16x16xf32>
    %41 = vector.extract_strided_slice %17 {offsets = [0, 48], sizes = [16, 16], strides = [1, 1]} : vector<16x64xf32> to vector<16x16xf32>
    %42 = vector.extract_strided_slice %20 {offsets = [0, 0], sizes = [16, 16], strides = [1, 1]} : vector<16x64xf32> to vector<16x16xf32>
    %43 = vector.extract_strided_slice %20 {offsets = [0, 16], sizes = [16, 16], strides = [1, 1]} : vector<16x64xf32> to vector<16x16xf32>
    %44 = vector.extract_strided_slice %20 {offsets = [0, 32], sizes = [16, 16], strides = [1, 1]} : vector<16x64xf32> to vector<16x16xf32>
    %45 = vector.extract_strided_slice %20 {offsets = [0, 48], sizes = [16, 16], strides = [1, 1]} : vector<16x64xf32> to vector<16x16xf32>
    %46 = vector.extract_strided_slice %21 {offsets = [0, 0], sizes = [16, 16], strides = [1, 1]} : vector<16x64xf32> to vector<16x16xf32>
    %47 = vector.extract_strided_slice %21 {offsets = [0, 16], sizes = [16, 16], strides = [1, 1]} : vector<16x64xf32> to vector<16x16xf32>
    %48 = vector.extract_strided_slice %21 {offsets = [0, 32], sizes = [16, 16], strides = [1, 1]} : vector<16x64xf32> to vector<16x16xf32>
    %49 = vector.extract_strided_slice %21 {offsets = [0, 48], sizes = [16, 16], strides = [1, 1]} : vector<16x64xf32> to vector<16x16xf32>
    %50 = vector.shape_cast %22 : vector<16x16xf32> to vector<1x16x16xf32>
    %51 = vector.shape_cast %23 : vector<16x16xf32> to vector<1x16x16xf32>
    %52 = vector.shape_cast %24 : vector<16x16xf32> to vector<1x16x16xf32>
    %53 = vector.shape_cast %25 : vector<16x16xf32> to vector<1x16x16xf32>
    %54 = vector.shape_cast %26 : vector<16x16xf32> to vector<1x16x16xf32>
    %55 = vector.shape_cast %27 : vector<16x16xf32> to vector<1x16x16xf32>
    %56 = vector.shape_cast %28 : vector<16x16xf32> to vector<1x16x16xf32>
    %57 = vector.shape_cast %29 : vector<16x16xf32> to vector<1x16x16xf32>
    %58 = vector.shape_cast %30 : vector<16x16xf32> to vector<1x16x16xf32>
    %59 = vector.shape_cast %31 : vector<16x16xf32> to vector<1x16x16xf32>
    %60 = vector.shape_cast %32 : vector<16x16xf32> to vector<1x16x16xf32>
    %61 = vector.shape_cast %33 : vector<16x16xf32> to vector<1x16x16xf32>
    %62 = vector.shape_cast %34 : vector<16x16xf32> to vector<1x16x16xf32>
    %63 = vector.shape_cast %35 : vector<16x16xf32> to vector<1x16x16xf32>
    %64 = vector.shape_cast %36 : vector<16x16xf32> to vector<1x16x16xf32>
    %65 = vector.shape_cast %37 : vector<16x16xf32> to vector<1x16x16xf32>
    %66 = vector.shape_cast %38 : vector<16x16xf32> to vector<1x16x16xf32>
    %67 = vector.shape_cast %39 : vector<16x16xf32> to vector<1x16x16xf32>
    %68 = vector.shape_cast %40 : vector<16x16xf32> to vector<1x16x16xf32>
    %69 = vector.shape_cast %41 : vector<16x16xf32> to vector<1x16x16xf32>
    %70 = vector.shape_cast %42 : vector<16x16xf32> to vector<1x16x16xf32>
    %71 = vector.shape_cast %43 : vector<16x16xf32> to vector<1x16x16xf32>
    %72 = vector.shape_cast %44 : vector<16x16xf32> to vector<1x16x16xf32>
    %73 = vector.shape_cast %45 : vector<16x16xf32> to vector<1x16x16xf32>
    %74 = vector.shape_cast %46 : vector<16x16xf32> to vector<1x16x16xf32>
    %75 = vector.shape_cast %47 : vector<16x16xf32> to vector<1x16x16xf32>
    %76 = vector.shape_cast %48 : vector<16x16xf32> to vector<1x16x16xf32>
    %77 = vector.shape_cast %49 : vector<16x16xf32> to vector<1x16x16xf32>
    %78 = tpu.concatenate %50, %51, %52, %53, %54, %55, %56, %57, %58, %59, %60, %61, %62, %63, %64, %65 in 0 : vector<1x16x16xf32>, vector<1x16x16xf32>, vector<1x16x16xf32>, vector<1x16x16xf32>, vector<1x16x16xf32>, vector<1x16x16xf32>, vector<1x16x16xf32>, vector<1x16x16xf32>, vector<1x16x16xf32>, vector<1x16x16xf32>, vector<1x16x16xf32>, vector<1x16x16xf32>, vector<1x16x16xf32>, vector<1x16x16xf32>, vector<1x16x16xf32>, vector<1x16x16xf32> -> vector<16x16x16xf32>
    %79 = tpu.concatenate %66, %67, %68, %69, %70, %71, %72, %73, %74, %75, %76, %77 in 0 : vector<1x16x16xf32>, vector<1x16x16xf32>, vector<1x16x16xf32>, vector<1x16x16xf32>, vector<1x16x16xf32>, vector<1x16x16xf32>, vector<1x16x16xf32>, vector<1x16x16xf32>, vector<1x16x16xf32>, vector<1x16x16xf32>, vector<1x16x16xf32>, vector<1x16x16xf32> -> vector<12x16x16xf32>
    %80 = tpu.concatenate %78, %79 in 0 : vector<16x16x16xf32>, vector<12x16x16xf32> -> vector<28x16x16xf32>
    %81 = vector.shape_cast %80 : vector<28x16x16xf32> to vector<28x256xf32>
    %c0_14 = arith.constant 0 : index
    %c0_15 = arith.constant 0 : index
    %82 = vector.load %arg3[%c0_14, %c0_15] : memref<32x28xf32, #tpu.memory_space<vmem>>, vector<32x28xf32>
    %cst_16 = arith.constant dense<0.000000e+00> : vector<32x256xf32>
    %83 = tpu.matmul %82, %81, %cst_16 {dimension_numbers = #tpu.dot_dimension_numbers<[1], [0], [0], [1], [0, 0, 1, 1], [], []>} : vector<32x28xf32>, vector<28x256xf32>, vector<32x256xf32> -> vector<32x256xf32>
    %c0_17 = arith.constant 0 : index
    %c0_18 = arith.constant 0 : index
    %84 = vector.load %arg4[%c0_17, %c0_18] : memref<32x1xf32, #tpu.memory_space<vmem>>, vector<32x1xf32>
    %85 = vector.broadcast %84 : vector<32x1xf32> to vector<32x256xf32>
    %86 = arith.addf %83, %85 : vector<32x256xf32>
    %87 = vector.shape_cast %86 : vector<32x256xf32> to vector<32x16x16xf32>
    %c0_19 = arith.constant 0 : index
    %c0_20 = arith.constant 0 : index
    %c0_21 = arith.constant 0 : index
    %88 = vector.load %arg5[%c0_19, %c0_20, %c0_21] : memref<32x16x16xf32, #tpu.memory_space<vmem>>, vector<32x16x16xf32>
    tpu.vector_store %arg5[%c0_19, %c0_20, %c0_21], %87 {strides = array<i32>} : memref<32x16x16xf32, #tpu.memory_space<vmem>>, vector<32x16x16xf32>,
    return
  }
  func.func @transform_0(%arg0: i32) -> (i32, i32, i32) {
    %c0_i32 = arith.constant 0 : i32
    %c0_i32_0 = arith.constant 0 : i32
    %c0_i32_1 = arith.constant 0 : i32
    return %c0_i32, %c0_i32_0, %arg0 : i32, i32, i32
  }
  func.func @transform_1(%arg0: i32) -> (i32, i32, i32) {
    %c0_i32 = arith.constant 0 : i32
    %c0_i32_0 = arith.constant 0 : i32
    %c0_i32_1 = arith.constant 0 : i32
    %c0_i32_2 = arith.constant 0 : i32
    return %c0_i32, %c0_i32_0, %c0_i32_1 : i32, i32, i32
  }
  func.func @transform_2(%arg0: i32) -> (i32, i32) {
    %c0_i32 = arith.constant 0 : i32
    %c0_i32_0 = arith.constant 0 : i32
    %c0_i32_1 = arith.constant 0 : i32
    return %c0_i32, %c0_i32_0 : i32, i32
  }
  func.func @transform_3(%arg0: i32) -> (i32, i32) {
    %c0_i32 = arith.constant 0 : i32
    %c0_i32_0 = arith.constant 0 : i32
    %c0_i32_1 = arith.constant 0 : i32
    return %c0_i32, %c0_i32_0 : i32, i32
  }
  func.func @transform_4(%arg0: i32) -> (i32, i32, i32) {
    %c0_i32 = arith.constant 0 : i32
    %c0_i32_0 = arith.constant 0 : i32
    %c0_i32_1 = arith.constant 0 : i32
    return %c0_i32, %c0_i32_0, %arg0 : i32, i32, i32
  }
}

</mosaic_0001>

<llo_original>
// kernel: tpu_custom_call.1
$region0: #{tpu_custom_call.1}
  #allocation0 [shape = 'u32[]', space=smem, size = 0x4, offset = 0x4, fixed_abs, tag = 'smem constant byte address 0x4 - core index']
  #allocation1 [shape = 'u32[144,128]{1,0:T(1,128)}', space=vmem, size = 0x12000, scoped, tag = 'internal scratch']
  %s0 = inlined_call_operand.hbm [shape: f32[4,16,16], index: 0, kind: input, shape index: {}]
  %s1 = inlined_call_operand.hbm [shape: f32[3,16,16], index: 1, kind: input, shape index: {}]
  %s2 = inlined_call_operand.vmem [shape: f32[32,28], index: 2, kind: input, shape index: {}]
  %s3 = inlined_call_operand.vmem [shape: f32[32,1], index: 3, kind: input, shape index: {}]
  %s4 = inlined_call_operand.vmem [shape: f32[32,16,16], index: 4, kind: output, shape index: {}]
  %s5 = sld [smem:[#allocation0]]
  $region34: #{tpu_custom_call.1} parent=0
    _
  %s7 = ssub.s32 1, %s5
  %s8 = scalar_select 0, %s7, %s5
  $region1: #{tpu_custom_call.1} parent=0
    #allocation2 [shape = 'u8[32768]{0}', space=vmem, size = 0x8000, scoped, tag = 'input window, operand 0, single buffered']
    #allocation3 [shape = 's32[1]{0}', space=sflag, size = 0x4, scoped, tag = 'scoped memory for tpu_custom_call.1']
    #allocation4 [shape = 'u8[24576]{0}', space=vmem, size = 0x6000, scoped, tag = 'input window, operand 1, single buffered']
    #allocation5 [shape = 's32[1]{0}', space=sflag, size = 0x4, scoped, tag = 'scoped memory for tpu_custom_call.1']
    %9 = vsyncpa [#allocation3], 0
    %10 = vsyncpa [#allocation5], 0
    // Predicated region
    $region2: #{tpu_custom_call.1} parent=1 // pred_check
      _
    $region3: #{tpu_custom_call.1} parent=1 // pred_check_branch
      %12 = sbr.rel (0) target = $region5
    $region4: #{tpu_custom_call.1} parent=1 // pred_region
      %s14 = ssub.s32 1024, 1024
      %15 = vsyncadd [#allocation3], %s14
      %s16 = sshll.u32 [#allocation2], 4
      %s17 = int_to_ptr.vmem [resolvable:$true] %s16
      %22 = dma.hbm_to_vmem [thread:$0]  %s0, 1024, %s17, [#allocation3], 128, 128, 8
    $region5: #{tpu_custom_call.1} parent=1 // pred_fallthru
      _
    // Predicated region
    $region6: #{tpu_custom_call.1} parent=1 // pred_check
      _
    $region7: #{tpu_custom_call.1} parent=1 // pred_check_branch
      %24 = sbr.rel (0) target = $region9
    $region8: #{tpu_custom_call.1} parent=1 // pred_region
      %s26 = ssub.s32 768, 768
      %27 = vsyncadd [#allocation5], %s26
      %s28 = sshll.u32 [#allocation4], 4
      %s29 = int_to_ptr.vmem [resolvable:$true] %s28
      %34 = dma.hbm_to_vmem [thread:$0]  %s1, 768, %s29, [#allocation5], 128, 128, 8
    $region9: #{tpu_custom_call.1} parent=1 // pred_fallthru
      _
    // Predicated region
    $region10: #{tpu_custom_call.1} parent=1 // pred_check
      _
    $region11: #{tpu_custom_call.1} parent=1 // pred_check_branch
      %36 = sbr.rel (0) target = $region13
    $region12: #{tpu_custom_call.1} parent=1 // pred_region
      _
    $region13: #{tpu_custom_call.1} parent=1 // pred_fallthru
      _
    // Predicated region
    $region14: #{tpu_custom_call.1} parent=1 // pred_check
      _
    $region15: #{tpu_custom_call.1} parent=1 // pred_check_branch
      %38 = sbr.rel (0) target = $region17
    $region16: #{tpu_custom_call.1} parent=1 // pred_region
      _
    $region17: #{tpu_custom_call.1} parent=1 // pred_fallthru
      _
    // Predicated region
    $region18: #{tpu_custom_call.1} parent=1 // pred_check
      _
    $region19: #{tpu_custom_call.1} parent=1 // pred_check_branch
      %40 = sbr.rel (0) target = $region21
    $region20: #{tpu_custom_call.1} parent=1 // pred_region
      %41 = dma.done [#allocation3], 1024
    $region21: #{tpu_custom_call.1} parent=1 // pred_fallthru
      _
    // Predicated region
    $region22: #{tpu_custom_call.1} parent=1 // pred_check
      _
    $region23: #{tpu_custom_call.1} parent=1 // pred_check_branch
      %43 = sbr.rel (0) target = $region25
    $region24: #{tpu_custom_call.1} parent=1 // pred_region
      %44 = dma.done [#allocation5], 768
    $region25: #{tpu_custom_call.1} parent=1 // pred_fallthru
      _
    %v45 = vld [vmem:[#allocation2] sm:$0xff]
    %v46 = vld [vmem:[#allocation2 + $0x8] sm:$0xff]
    %v47 = vld [vmem:[#allocation2 + $0x10] sm:$0xff]
    %v48 = vld [vmem:[#allocation2 + $0x18] sm:$0xff]
    %v49 = vld [vmem:[#allocation2 + $0x20] sm:$0xff]
    %v50 = vld [vmem:[#allocation2 + $0x28] sm:$0xff]
    %v51 = vld [vmem:[#allocation2 + $0x30] sm:$0xff]
    %v52 = vld [vmem:[#allocation2 + $0x38] sm:$0xff]
    %55 = vrot.lane.b32.xlu0 %v47, 16
    %v56 = vpop.permute.xlu0 %55
    %57 = vrot.lane.b32.xlu0 %v48, 16
    %v58 = vpop.permute.xlu0 %57
    %63 = vrot.lane.b32.xlu0 %v49, 32
    %v64 = vpop.permute.xlu0 %63
    %65 = vrot.lane.b32.xlu0 %v50, 32
    %v66 = vpop.permute.xlu0 %65
    %71 = vrot.lane.b32.xlu0 %v51, 48
    %v72 = vpop.permute.xlu0 %71
    %73 = vrot.lane.b32.xlu0 %v52, 48
    %v74 = vpop.permute.xlu0 %73
    %vm77 = vcmask 130048
    %v78 = vsel %vm77, %v45, %v56
    %v79 = vsel %vm77, %v46, %v58
    %vm80 = vcmask 261120
    %v81 = vsel %vm80, %v78, %v64
    %v82 = vsel %vm80, %v79, %v66
    %vm83 = vcmask 392192
    %v84 = vsel %vm83, %v81, %v72
    %v85 = vsel %vm83, %v82, %v74
    %v86 = vld [vmem:[#allocation4] sm:$0xff]
    %v87 = vld [vmem:[#allocation4 + $0x8] sm:$0xff]
    %v89 = vsel %vm77, %v86, 0
    %v92 = vsel %vm77, %v87, 0
    %94 = vmatprep.subr.mxu0 0.0
    %95 = vmatpush1.msra.mxu0 0.0
    %96 = vmatprep.subr.mxu0 0.0
    %97 = vmatpush1.msra.mxu0 0.0
    %98 = vmatprep.subr.mxu0 0.0
    %99 = vmatpush1.msra.mxu0 0.0
    %100 = vmatprep.subr.mxu0 0.0
    %101 = vmatpush1.msra.mxu0 0.0
    %102 = vmatprep.subr.mxu0 0.0
    %103 = vmatpush1.msra.mxu0 0.0
    %104 = vmatprep.subr.mxu0 0.0
    %105 = vmatpush1.msra.mxu0 0.0
    %106 = vmatprep.subr.mxu0 0.0
    %107 = vmatpush1.msra.mxu0 0.0
    %108 = vmatprep.subr.mxu0 0.0
    %109 = vmatpush1.msra.mxu0 0.0
    %110 = vmatprep.subr.mxu0 0.0
    %111 = vmatpush1.msra.mxu0 0.0
    %112 = vmatprep.subr.mxu0 0.0
    %113 = vmatpush1.msra.mxu0 0.0
    %114 = vmatprep.subr.mxu0 0.0
    %115 = vmatpush1.msra.mxu0 0.0
    %116 = vmatprep.subr.mxu0 0.0
    %117 = vmatpush1.msra.mxu0 0.0
    %118 = vmatprep.subr.mxu0 0.0
    %119 = vmatpush1.msra.mxu0 0.0
    %120 = vmatprep.subr.mxu0 0.0
    %121 = vmatpush1.msra.mxu0 0.0
    %122 = vmatprep.subr.mxu0 0.0
    %123 = vmatpush1.msra.mxu0 %v85
    %124 = vmatprep.subr.mxu0 0.0
    %125 = vmatpush1.msra.mxu0 %v84
    %126 = vmatprep.subr.mxu0 0.0
    %127 = vmatpush2.msra.mxu0 0.0
    %128 = vmatprep.subr.mxu0 0.0
    %129 = vmatpush2.msra.mxu0 0.0
    %130 = vmatprep.subr.mxu0 0.0
    %131 = vmatpush2.msra.mxu0 0.0
    %132 = vmatprep.subr.mxu0 0.0
    %133 = vmatpush2.msra.mxu0 0.0
    %134 = vmatprep.subr.mxu0 0.0
    %135 = vmatpush2.msra.mxu0 0.0
    %136 = vmatprep.subr.mxu0 0.0
    %137 = vmatpush2.msra.mxu0 0.0
    %138 = vmatprep.subr.mxu0 0.0
    %139 = vmatpush2.msra.mxu0 0.0
    %140 = vmatprep.subr.mxu0 0.0
    %141 = vmatpush2.msra.mxu0 0.0
    %142 = vmatprep.subr.mxu0 0.0
    %143 = vmatpush2.msra.mxu0 0.0
    %144 = vmatprep.subr.mxu0 0.0
    %145 = vmatpush2.msra.mxu0 0.0
    %146 = vmatprep.subr.mxu0 0.0
    %147 = vmatpush2.msra.mxu0 0.0
    %148 = vmatprep.subr.mxu0 0.0
    %149 = vmatpush2.msra.mxu0 0.0
    %150 = vmatprep.subr.mxu0 0.0
    %151 = vmatpush2.msra.mxu0 0.0
    %152 = vmatprep.subr.mxu0 0.0
    %153 = vmatpush2.msra.mxu0 0.0
    %154 = vmatprep.subr.mxu0 0.0
    %155 = vmatpush2.msra.mxu0 0.0
    %156 = vmatprep.subr.mxu0 0.0
    %157 = vmatpush2.msra.mxu0 0.0
    %158 = vmatprep.mubr.f32.mxu0 0.0
    %159 = vmatmul.mubr.f32.gmra.mxu0 %v89
    %v160 = vpop.f32.mrf.mxu0
    %v161 = vadd.f32 0.0, %v160
    %v162 = vpop.f32.mrf.mxu0
    %163 = vmatprep.mubr.f32.mxu0 0.0
    %164 = vmatmul.mubr.f32.gmra.mxu0 %v92
    %v165 = vpop.f32.mrf.mxu0
    %v166 = vadd.f32 0.0, %v165
    %v167 = vpop.f32.mrf.mxu0
    %168 = vdwg.mxu0
    %169 = vmatprep.subr.mxu0 0.0
    %170 = vmatpush1.msra.mxu0 0.0
    %171 = vmatprep.subr.mxu0 0.0
    %172 = vmatpush1.msra.mxu0 0.0
    %173 = vmatprep.subr.mxu0 0.0
    %174 = vmatpush1.msra.mxu0 0.0
    %175 = vmatprep.subr.mxu0 0.0
    %176 = vmatpush1.msra.mxu0 0.0
    %177 = vmatprep.subr.mxu0 0.0
    %178 = vmatpush1.msra.mxu0 0.0
    %179 = vmatprep.subr.mxu0 0.0
    %180 = vmatpush1.msra.mxu0 0.0
    %181 = vmatprep.subr.mxu0 0.0
    %182 = vmatpush1.msra.mxu0 0.0
    %183 = vmatprep.subr.mxu0 0.0
    %184 = vmatpush1.msra.mxu0 0.0
    %185 = vmatprep.subr.mxu0 0.0
    %186 = vmatpush1.msra.mxu0 0.0
    %187 = vmatprep.subr.mxu0 0.0
    %188 = vmatpush1.msra.mxu0 0.0
    %189 = vmatprep.subr.mxu0 0.0
    %190 = vmatpush1.msra.mxu0 0.0
    %191 = vmatprep.subr.mxu0 0.0
    %192 = vmatpush1.msra.mxu0 0.0
    %193 = vmatprep.subr.mxu0 0.0
    %194 = vmatpush1.msra.mxu0 0.0
    %195 = vmatprep.subr.mxu0 0.0
    %196 = vmatpush1.msra.mxu0 0.0
    %197 = vmatprep.subr.mxu0 0.0
    %198 = vmatpush1.msra.mxu0 %v166
    %199 = vmatprep.subr.mxu0 0.0
    %200 = vmatpush1.msra.mxu0 %v161
    %201 = vmatprep.subr.mxu0 0.0
    %202 = vmatpush2.msra.mxu0 0.0
    %203 = vmatprep.subr.mxu0 0.0
    %204 = vmatpush2.msra.mxu0 0.0
    %205 = vmatprep.subr.mxu0 0.0
    %206 = vmatpush2.msra.mxu0 0.0
    %207 = vmatprep.subr.mxu0 0.0
    %208 = vmatpush2.msra.mxu0 0.0
    %209 = vmatprep.subr.mxu0 0.0
    %210 = vmatpush2.msra.mxu0 0.0
    %211 = vmatprep.subr.mxu0 0.0
    %212 = vmatpush2.msra.mxu0 0.0
    %213 = vmatprep.subr.mxu0 0.0
    %214 = vmatpush2.msra.mxu0 0.0
    %215 = vmatprep.subr.mxu0 0.0
    %216 = vmatpush2.msra.mxu0 0.0
    %217 = vmatprep.subr.mxu0 0.0
    %218 = vmatpush2.msra.mxu0 0.0
    %219 = vmatprep.subr.mxu0 0.0
    %220 = vmatpush2.msra.mxu0 0.0
    %221 = vmatprep.subr.mxu0 0.0
    %222 = vmatpush2.msra.mxu0 0.0
    %223 = vmatprep.subr.mxu0 0.0
    %224 = vmatpush2.msra.mxu0 0.0
    %225 = vmatprep.subr.mxu0 0.0
    %226 = vmatpush2.msra.mxu0 0.0
    %227 = vmatprep.subr.mxu0 0.0
    %228 = vmatpush2.msra.mxu0 0.0
    %229 = vmatprep.subr.mxu0 0.0
    %230 = vmatpush2.msra.mxu0 0.0
    %231 = vmatprep.subr.mxu0 0.0
    %232 = vmatpush2.msra.mxu0 0.0
    %233 = vmatprep.mubr.f32.mxu0 0.0
    %234 = vmatmul.mubr.f32.gmra.mxu0 %v89
    %v235 = vpop.f32.mrf.mxu0
    %v236 = vadd.f32 0.0, %v235
    %v237 = vpop.f32.mrf.mxu0
    %238 = vmatprep.mubr.f32.mxu0 0.0
    %239 = vmatmul.mubr.f32.gmra.mxu0 %v92
    %v240 = vpop.f32.mrf.mxu0
    %v241 = vadd.f32 0.0, %v240
    %v242 = vpop.f32.mrf.mxu0
    %243 = vdwg.mxu0
    %s244 = scalar_lea.vmem [#allocation4], 16
    %v245 = vld [vmem:[%s244] sm:$0xff]
    %v246 = vld [vmem:[%s244 + $0x8] sm:$0xff]
    %v248 = vsel %vm77, %v245, 0
    %v251 = vsel %vm77, %v246, 0
    %253 = vmatprep.subr.mxu0 0.0
    %254 = vmatpush1.msra.mxu0 0.0
    %255 = vmatprep.subr.mxu0 0.0
    %256 = vmatpush1.msra.mxu0 0.0
    %257 = vmatprep.subr.mxu0 0.0
    %258 = vmatpush1.msra.mxu0 0.0
    %259 = vmatprep.subr.mxu0 0.0
    %260 = vmatpush1.msra.mxu0 0.0
    %261 = vmatprep.subr.mxu0 0.0
    %262 = vmatpush1.msra.mxu0 0.0
    %263 = vmatprep.subr.mxu0 0.0
    %264 = vmatpush1.msra.mxu0 0.0
    %265 = vmatprep.subr.mxu0 0.0
    %266 = vmatpush1.msra.mxu0 0.0
    %267 = vmatprep.subr.mxu0 0.0
    %268 = vmatpush1.msra.mxu0 0.0
    %269 = vmatprep.subr.mxu0 0.0
    %270 = vmatpush1.msra.mxu0 0.0
    %271 = vmatprep.subr.mxu0 0.0
    %272 = vmatpush1.msra.mxu0 0.0
    %273 = vmatprep.subr.mxu0 0.0
    %274 = vmatpush1.msra.mxu0 0.0
    %275 = vmatprep.subr.mxu0 0.0
    %276 = vmatpush1.msra.mxu0 0.0
    %277 = vmatprep.subr.mxu0 0.0
    %278 = vmatpush1.msra.mxu0 0.0
    %279 = vmatprep.subr.mxu0 0.0
    %280 = vmatpush1.msra.mxu0 0.0
    %281 = vmatprep.subr.mxu0 0.0
    %282 = vmatpush1.msra.mxu0 %v85
    %283 = vmatprep.subr.mxu0 0.0
    %284 = vmatpush1.msra.mxu0 %v84
    %285 = vmatprep.subr.mxu0 0.0
    %286 = vmatpush2.msra.mxu0 0.0
    %287 = vmatprep.subr.mxu0 0.0
    %288 = vmatpush2.msra.mxu0 0.0
    %289 = vmatprep.subr.mxu0 0.0
    %290 = vmatpush2.msra.mxu0 0.0
    %291 = vmatprep.subr.mxu0 0.0
    %292 = vmatpush2.msra.mxu0 0.0
    %293 = vmatprep.subr.mxu0 0.0
    %294 = vmatpush2.msra.mxu0 0.0
    %295 = vmatprep.subr.mxu0 0.0
    %296 = vmatpush2.msra.mxu0 0.0
    %297 = vmatprep.subr.mxu0 0.0
    %298 = vmatpush2.msra.mxu0 0.0
    %299 = vmatprep.subr.mxu0 0.0
    %300 = vmatpush2.msra.mxu0 0.0
    %301 = vmatprep.subr.mxu0 0.0
    %302 = vmatpush2.msra.mxu0 0.0
    %303 = vmatprep.subr.mxu0 0.0
    %304 = vmatpush2.msra.mxu0 0.0
    %305 = vmatprep.subr.mxu0 0.0
    %306 = vmatpush2.msra.mxu0 0.0
    %307 = vmatprep.subr.mxu0 0.0
    %308 = vmatpush2.msra.mxu0 0.0
    %309 = vmatprep.subr.mxu0 0.0
    %310 = vmatpush2.msra.mxu0 0.0
    %311 = vmatprep.subr.mxu0 0.0
    %312 = vmatpush2.msra.mxu0 0.0
    %313 = vmatprep.subr.mxu0 0.0
    %314 = vmatpush2.msra.mxu0 0.0
    %315 = vmatprep.subr.mxu0 0.0
    %316 = vmatpush2.msra.mxu0 0.0
    %317 = vmatprep.mubr.f32.mxu0 0.0
    %318 = vmatmul.mubr.f32.gmra.mxu0 %v248
    %v319 = vpop.f32.mrf.mxu0
    %v320 = vadd.f32 0.0, %v319
    %v321 = vpop.f32.mrf.mxu0
    %322 = vmatprep.mubr.f32.mxu0 0.0
    %323 = vmatmul.mubr.f32.gmra.mxu0 %v251
    %v324 = vpop.f32.mrf.mxu0
    %v325 = vadd.f32 0.0, %v324
    %v326 = vpop.f32.mrf.mxu0
    %327 = vdwg.mxu0
    %328 = vmatprep.subr.mxu0 0.0
    %329 = vmatpush1.msra.mxu0 0.0
    %330 = vmatprep.subr.mxu0 0.0
    %331 = vmatpush1.msra.mxu0 0.0
    %332 = vmatprep.subr.mxu0 0.0
    %333 = vmatpush1.msra.mxu0 0.0
    %334 = vmatprep.subr.mxu0 0.0
    %335 = vmatpush1.msra.mxu0 0.0
    %336 = vmatprep.subr.mxu0 0.0
    %337 = vmatpush1.msra.mxu0 0.0
    %338 = vmatprep.subr.mxu0 0.0
    %339 = vmatpush1.msra.mxu0 0.0
    %340 = vmatprep.subr.mxu0 0.0
    %341 = vmatpush1.msra.mxu0 0.0
    %342 = vmatprep.subr.mxu0 0.0
    %343 = vmatpush1.msra.mxu0 0.0
    %344 = vmatprep.subr.mxu0 0.0
    %345 = vmatpush1.msra.mxu0 0.0
    %346 = vmatprep.subr.mxu0 0.0
    %347 = vmatpush1.msra.mxu0 0.0
    %348 = vmatprep.subr.mxu0 0.0
    %349 = vmatpush1.msra.mxu0 0.0
    %350 = vmatprep.subr.mxu0 0.0
    %351 = vmatpush1.msra.mxu0 0.0
    %352 = vmatprep.subr.mxu0 0.0
    %353 = vmatpush1.msra.mxu0 0.0
    %354 = vmatprep.subr.mxu0 0.0
    %355 = vmatpush1.msra.mxu0 0.0
    %356 = vmatprep.subr.mxu0 0.0
    %357 = vmatpush1.msra.mxu0 %v325
    %358 = vmatprep.subr.mxu0 0.0
    %359 = vmatpush1.msra.mxu0 %v320
    %360 = vmatprep.subr.mxu0 0.0
    %361 = vmatpush2.msra.mxu0 0.0
    %362 = vmatprep.subr.mxu0 0.0
    %363 = vmatpush2.msra.mxu0 0.0
    %364 = vmatprep.subr.mxu0 0.0
    %365 = vmatpush2.msra.mxu0 0.0
    %366 = vmatprep.subr.mxu0 0.0
    %367 = vmatpush2.msra.mxu0 0.0
    %368 = vmatprep.subr.mxu0 0.0
    %369 = vmatpush2.msra.mxu0 0.0
    %370 = vmatprep.subr.mxu0 0.0
    %371 = vmatpush2.msra.mxu0 0.0
    %372 = vmatprep.subr.mxu0 0.0
    %373 = vmatpush2.msra.mxu0 0.0
    %374 = vmatprep.subr.mxu0 0.0
    %375 = vmatpush2.msra.mxu0 0.0
    %376 = vmatprep.subr.mxu0 0.0
    %377 = vmatpush2.msra.mxu0 0.0
    %378 = vmatprep.subr.mxu0 0.0
    %379 = vmatpush2.msra.mxu0 0.0
    %380 = vmatprep.subr.mxu0 0.0
    %381 = vmatpush2.msra.mxu0 0.0
    %382 = vmatprep.subr.mxu0 0.0
    %383 = vmatpush2.msra.mxu0 0.0
    %384 = vmatprep.subr.mxu0 0.0
    %385 = vmatpush2.msra.mxu0 0.0
    %386 = vmatprep.subr.mxu0 0.0
    %387 = vmatpush2.msra.mxu0 0.0
    %388 = vmatprep.subr.mxu0 0.0
    %389 = vmatpush2.msra.mxu0 0.0
    %390 = vmatprep.subr.mxu0 0.0
    %391 = vmatpush2.msra.mxu0 0.0
    %392 = vmatprep.mubr.f32.mxu0 0.0
    %393 = vmatmul.mubr.f32.gmra.mxu0 %v248
    %v394 = vpop.f32.mrf.mxu0
    %v395 = vadd.f32 0.0, %v394
    %v396 = vpop.f32.mrf.mxu0
    %397 = vmatprep.mubr.f32.mxu0 0.0
    %398 = vmatmul.mubr.f32.gmra.mxu0 %v251
    %v399 = vpop.f32.mrf.mxu0
    %v400 = vadd.f32 0.0, %v399
    %v401 = vpop.f32.mrf.mxu0
    %402 = vdwg.mxu0
    %s403 = scalar_lea.vmem [#allocation4], 32
    %v404 = vld [vmem:[%s403] sm:$0xff]
    %v405 = vld [vmem:[%s403 + $0x8] sm:$0xff]
    %v407 = vsel %vm77, %v404, 0
    %v410 = vsel %vm77, %v405, 0
    %412 = vmatprep.subr.mxu0 0.0
    %413 = vmatpush1.msra.mxu0 0.0
    %414 = vmatprep.subr.mxu0 0.0
    %415 = vmatpush1.msra.mxu0 0.0
    %416 = vmatprep.subr.mxu0 0.0
    %417 = vmatpush1.msra.mxu0 0.0
    %418 = vmatprep.subr.mxu0 0.0
    %419 = vmatpush1.msra.mxu0 0.0
    %420 = vmatprep.subr.mxu0 0.0
    %421 = vmatpush1.msra.mxu0 0.0
    %422 = vmatprep.subr.mxu0 0.0
    %423 = vmatpush1.msra.mxu0 0.0
    %424 = vmatprep.subr.mxu0 0.0
    %425 = vmatpush1.msra.mxu0 0.0
    %426 = vmatprep.subr.mxu0 0.0
    %427 = vmatpush1.msra.mxu0 0.0
    %428 = vmatprep.subr.mxu0 0.0
    %429 = vmatpush1.msra.mxu0 0.0
    %430 = vmatprep.subr.mxu0 0.0
    %431 = vmatpush1.msra.mxu0 0.0
    %432 = vmatprep.subr.mxu0 0.0
    %433 = vmatpush1.msra.mxu0 0.0
    %434 = vmatprep.subr.mxu0 0.0
    %435 = vmatpush1.msra.mxu0 0.0
    %436 = vmatprep.subr.mxu0 0.0
    %437 = vmatpush1.msra.mxu0 0.0
    %438 = vmatprep.subr.mxu0 0.0
    %439 = vmatpush1.msra.mxu0 0.0
    %440 = vmatprep.subr.mxu0 0.0
    %441 = vmatpush1.msra.mxu0 %v85
    %442 = vmatprep.subr.mxu0 0.0
    %443 = vmatpush1.msra.mxu0 %v84
    %444 = vmatprep.subr.mxu0 0.0
    %445 = vmatpush2.msra.mxu0 0.0
    %446 = vmatprep.subr.mxu0 0.0
    %447 = vmatpush2.msra.mxu0 0.0
    %448 = vmatprep.subr.mxu0 0.0
    %449 = vmatpush2.msra.mxu0 0.0
    %450 = vmatprep.subr.mxu0 0.0
    %451 = vmatpush2.msra.mxu0 0.0
    %452 = vmatprep.subr.mxu0 0.0
    %453 = vmatpush2.msra.mxu0 0.0
    %454 = vmatprep.subr.mxu0 0.0
    %455 = vmatpush2.msra.mxu0 0.0
    %456 = vmatprep.subr.mxu0 0.0
    %457 = vmatpush2.msra.mxu0 0.0
    %458 = vmatprep.subr.mxu0 0.0
    %459 = vmatpush2.msra.mxu0 0.0
    %460 = vmatprep.subr.mxu0 0.0
    %461 = vmatpush2.msra.mxu0 0.0
    %462 = vmatprep.subr.mxu0 0.0
    %463 = vmatpush2.msra.mxu0 0.0
    %464 = vmatprep.subr.mxu0 0.0
    %465 = vmatpush2.msra.mxu0 0.0
    %466 = vmatprep.subr.mxu0 0.0
    %467 = vmatpush2.msra.mxu0 0.0
    %468 = vmatprep.subr.mxu0 0.0
    %469 = vmatpush2.msra.mxu0 0.0
    %470 = vmatprep.subr.mxu0 0.0
    %471 = vmatpush2.msra.mxu0 0.0
    %472 = vmatprep.subr.mxu0 0.0
    %473 = vmatpush2.msra.mxu0 0.0
    %474 = vmatprep.subr.mxu0 0.0
    %475 = vmatpush2.msra.mxu0 0.0
    %476 = vmatprep.mubr.f32.mxu0 0.0
    %477 = vmatmul.mubr.f32.gmra.mxu0 %v407
    %v478 = vpop.f32.mrf.mxu0
    %v479 = vadd.f32 0.0, %v478
    %v480 = vpop.f32.mrf.mxu0
    %481 = vmatprep.mubr.f32.mxu0 0.0
    %482 = vmatmul.mubr.f32.gmra.mxu0 %v410
    %v483 = vpop.f32.mrf.mxu0
    %v484 = vadd.f32 0.0, %v483
    %v485 = vpop.f32.mrf.mxu0
    %486 = vdwg.mxu0
    %487 = vmatprep.subr.mxu0 0.0
    %488 = vmatpush1.msra.mxu0 0.0
    %489 = vmatprep.subr.mxu0 0.0
    %490 = vmatpush1.msra.mxu0 0.0
    %491 = vmatprep.subr.mxu0 0.0
    %492 = vmatpush1.msra.mxu0 0.0
    %493 = vmatprep.subr.mxu0 0.0
    %494 = vmatpush1.msra.mxu0 0.0
    %495 = vmatprep.subr.mxu0 0.0
    %496 = vmatpush1.msra.mxu0 0.0
    %497 = vmatprep.subr.mxu0 0.0
    %498 = vmatpush1.msra.mxu0 0.0
    %499 = vmatprep.subr.mxu0 0.0
    %500 = vmatpush1.msra.mxu0 0.0
    %501 = vmatprep.subr.mxu0 0.0
    %502 = vmatpush1.msra.mxu0 0.0
    %503 = vmatprep.subr.mxu0 0.0
    %504 = vmatpush1.msra.mxu0 0.0
    %505 = vmatprep.subr.mxu0 0.0
    %506 = vmatpush1.msra.mxu0 0.0
    %507 = vmatprep.subr.mxu0 0.0
    %508 = vmatpush1.msra.mxu0 0.0
    %509 = vmatprep.subr.mxu0 0.0
    %510 = vmatpush1.msra.mxu0 0.0
    %511 = vmatprep.subr.mxu0 0.0
    %512 = vmatpush1.msra.mxu0 0.0
    %513 = vmatprep.subr.mxu0 0.0
    %514 = vmatpush1.msra.mxu0 0.0
    %515 = vmatprep.subr.mxu0 0.0
    %516 = vmatpush1.msra.mxu0 %v484
    %517 = vmatprep.subr.mxu0 0.0
    %518 = vmatpush1.msra.mxu0 %v479
    %519 = vmatprep.subr.mxu0 0.0
    %520 = vmatpush2.msra.mxu0 0.0
    %521 = vmatprep.subr.mxu0 0.0
    %522 = vmatpush2.msra.mxu0 0.0
    %523 = vmatprep.subr.mxu0 0.0
    %524 = vmatpush2.msra.mxu0 0.0
    %525 = vmatprep.subr.mxu0 0.0
    %526 = vmatpush2.msra.mxu0 0.0
    %527 = vmatprep.subr.mxu0 0.0
    %528 = vmatpush2.msra.mxu0 0.0
    %529 = vmatprep.subr.mxu0 0.0
    %530 = vmatpush2.msra.mxu0 0.0
    %531 = vmatprep.subr.mxu0 0.0
    %532 = vmatpush2.msra.mxu0 0.0
    %533 = vmatprep.subr.mxu0 0.0
    %534 = vmatpush2.msra.mxu0 0.0
    %535 = vmatprep.subr.mxu0 0.0
    %536 = vmatpush2.msra.mxu0 0.0
    %537 = vmatprep.subr.mxu0 0.0
    %538 = vmatpush2.msra.mxu0 0.0
    %539 = vmatprep.subr.mxu0 0.0
    %540 = vmatpush2.msra.mxu0 0.0
    %541 = vmatprep.subr.mxu0 0.0
    %542 = vmatpush2.msra.mxu0 0.0
    %543 = vmatprep.subr.mxu0 0.0
    %544 = vmatpush2.msra.mxu0 0.0
    %545 = vmatprep.subr.mxu0 0.0
    %546 = vmatpush2.msra.mxu0 0.0
    %547 = vmatprep.subr.mxu0 0.0
    %548 = vmatpush2.msra.mxu0 0.0
    %549 = vmatprep.subr.mxu0 0.0
    %550 = vmatpush2.msra.mxu0 0.0
    %551 = vmatprep.mubr.f32.mxu0 0.0
    %552 = vmatmul.mubr.f32.gmra.mxu0 %v407
    %v553 = vpop.f32.mrf.mxu0
    %v554 = vadd.f32 0.0, %v553
    %v555 = vpop.f32.mrf.mxu0
    %556 = vmatprep.mubr.f32.mxu0 0.0
    %557 = vmatmul.mubr.f32.gmra.mxu0 %v410
    %v558 = vpop.f32.mrf.mxu0
    %v559 = vadd.f32 0.0, %v558
    %v560 = vpop.f32.mrf.mxu0
    %561 = vdwg.mxu0
    %564 = vrot.lane.b32.xlu0 %v84, 112
    %v565 = vpop.permute.xlu0 %564
    %566 = vrot.lane.b32.xlu0 %v85, 112
    %v567 = vpop.permute.xlu0 %566
    %570 = vrot.lane.b32.xlu0 %v84, 96
    %v571 = vpop.permute.xlu0 %570
    %572 = vrot.lane.b32.xlu0 %v85, 96
    %v573 = vpop.permute.xlu0 %572
    %576 = vrot.lane.b32.xlu0 %v84, 80
    %v577 = vpop.permute.xlu0 %576
    %578 = vrot.lane.b32.xlu0 %v85, 80
    %v579 = vpop.permute.xlu0 %578
    %584 = vrot.lane.b32.xlu0 %v161, 112
    %v585 = vpop.permute.xlu0 %584
    %586 = vrot.lane.b32.xlu0 %v166, 112
    %v587 = vpop.permute.xlu0 %586
    %590 = vrot.lane.b32.xlu0 %v161, 96
    %v591 = vpop.permute.xlu0 %590
    %592 = vrot.lane.b32.xlu0 %v166, 96
    %v593 = vpop.permute.xlu0 %592
    %596 = vrot.lane.b32.xlu0 %v161, 80
    %v597 = vpop.permute.xlu0 %596
    %598 = vrot.lane.b32.xlu0 %v166, 80
    %v599 = vpop.permute.xlu0 %598
    %604 = vrot.lane.b32.xlu0 %v236, 112
    %v605 = vpop.permute.xlu0 %604
    %606 = vrot.lane.b32.xlu0 %v241, 112
    %v607 = vpop.permute.xlu0 %606
    %610 = vrot.lane.b32.xlu0 %v236, 96
    %v611 = vpop.permute.xlu0 %610
    %612 = vrot.lane.b32.xlu0 %v241, 96
    %v613 = vpop.permute.xlu0 %612
    %616 = vrot.lane.b32.xlu0 %v236, 80
    %v617 = vpop.permute.xlu0 %616
    %618 = vrot.lane.b32.xlu0 %v241, 80
    %v619 = vpop.permute.xlu0 %618
    %624 = vrot.lane.b32.xlu0 %v320, 112
    %v625 = vpop.permute.xlu0 %624
    %626 = vrot.lane.b32.xlu0 %v325, 112
    %v627 = vpop.permute.xlu0 %626
    %630 = vrot.lane.b32.xlu0 %v320, 96
    %v631 = vpop.permute.xlu0 %630
    %632 = vrot.lane.b32.xlu0 %v325, 96
    %v633 = vpop.permute.xlu0 %632
    %636 = vrot.lane.b32.xlu0 %v320, 80
    %v637 = vpop.permute.xlu0 %636
    %638 = vrot.lane.b32.xlu0 %v325, 80
    %v639 = vpop.permute.xlu0 %638
    %644 = vrot.lane.b32.xlu0 %v395, 112
    %v645 = vpop.permute.xlu0 %644
    %646 = vrot.lane.b32.xlu0 %v400, 112
    %v647 = vpop.permute.xlu0 %646
    %650 = vrot.lane.b32.xlu0 %v395, 96
    %v651 = vpop.permute.xlu0 %650
    %652 = vrot.lane.b32.xlu0 %v400, 96
    %v653 = vpop.permute.xlu0 %652
    %656 = vrot.lane.b32.xlu0 %v395, 80
    %v657 = vpop.permute.xlu0 %656
    %658 = vrot.lane.b32.xlu0 %v400, 80
    %v659 = vpop.permute.xlu0 %658
    %664 = vrot.lane.b32.xlu0 %v479, 112
    %v665 = vpop.permute.xlu0 %664
    %666 = vrot.lane.b32.xlu0 %v484, 112
    %v667 = vpop.permute.xlu0 %666
    %670 = vrot.lane.b32.xlu0 %v479, 96
    %v671 = vpop.permute.xlu0 %670
    %672 = vrot.lane.b32.xlu0 %v484, 96
    %v673 = vpop.permute.xlu0 %672
    %676 = vrot.lane.b32.xlu0 %v479, 80
    %v677 = vpop.permute.xlu0 %676
    %678 = vrot.lane.b32.xlu0 %v484, 80
    %v679 = vpop.permute.xlu0 %678
    %684 = vrot.lane.b32.xlu0 %v554, 112
    %v685 = vpop.permute.xlu0 %684
    %686 = vrot.lane.b32.xlu0 %v559, 112
    %v687 = vpop.permute.xlu0 %686
    %690 = vrot.lane.b32.xlu0 %v554, 96
    %v691 = vpop.permute.xlu0 %690
    %692 = vrot.lane.b32.xlu0 %v559, 96
    %v693 = vpop.permute.xlu0 %692
    %696 = vrot.lane.b32.xlu0 %v554, 80
    %v697 = vpop.permute.xlu0 %696
    %698 = vrot.lane.b32.xlu0 %v559, 80
    %v699 = vpop.permute.xlu0 %698
    %v702 = vcombine.low %v84, %v571
    %v703 = vcombine.high %v84, %v571
    %v705 = vunpack.c.l.s4 1983009808
    %v706 = vunpack.c.0.s8 %v705
    %v707 = vlaneseq
    %v708 = vshrl.u32 %v707, 7
    %v709 = vsub.s32 %v706, %v708
    %v710 = vrot.slane %v702, %v709
    %v712 = vunpack.c.l.s4 1983009808
    %v713 = vunpack.c.0.s8 %v712
    %v714 = vlaneseq
    %v715 = vshrl.u32 %v714, 7
    %v716 = vsub.s32 %v713, %v715
    %v717 = vrot.slane %v703, %v716
    %v718 = vcombine.low %v565, %v577
    %v719 = vcombine.high %v565, %v577
    %v721 = vunpack.c.l.s4 1983009808
    %v722 = vunpack.c.0.s8 %v721
    %v723 = vlaneseq
    %v724 = vshrl.u32 %v723, 7
    %v725 = vsub.s32 %v722, %v724
    %v726 = vrot.slane %v718, %v725
    %v728 = vunpack.c.l.s4 1983009808
    %v729 = vunpack.c.0.s8 %v728
    %v730 = vlaneseq
    %v731 = vshrl.u32 %v730, 7
    %v732 = vsub.s32 %v729, %v731
    %v733 = vrot.slane %v719, %v732
    %v734 = vcombine.low %v161, %v591
    %v735 = vcombine.high %v161, %v591
    %v737 = vunpack.c.l.s4 1983009808
    %v738 = vunpack.c.0.s8 %v737
    %v739 = vlaneseq
    %v740 = vshrl.u32 %v739, 7
    %v741 = vsub.s32 %v738, %v740
    %v742 = vrot.slane %v734, %v741
    %v744 = vunpack.c.l.s4 1983009808
    %v745 = vunpack.c.0.s8 %v744
    %v746 = vlaneseq
    %v747 = vshrl.u32 %v746, 7
    %v748 = vsub.s32 %v745, %v747
    %v749 = vrot.slane %v735, %v748
    %v750 = vcombine.low %v585, %v597
    %v751 = vcombine.high %v585, %v597
    %v753 = vunpack.c.l.s4 1983009808
    %v754 = vunpack.c.0.s8 %v753
    %v755 = vlaneseq
    %v756 = vshrl.u32 %v755, 7
    %v757 = vsub.s32 %v754, %v756
    %v758 = vrot.slane %v750, %v757
    %v760 = vunpack.c.l.s4 1983009808
    %v761 = vunpack.c.0.s8 %v760
    %v762 = vlaneseq
    %v763 = vshrl.u32 %v762, 7
    %v764 = vsub.s32 %v761, %v763
    %v765 = vrot.slane %v751, %v764
    %v766 = vcombine.low %v710, %v726
    %v767 = vcombine.high %v710, %v726
    %v769 = vunpack.c.l.s4 1934713408
    %v770 = vunpack.c.0.s8 %v769
    %v771 = vlaneseq
    %v772 = vshrl.u32 %v771, 7
    %v773 = vsub.s32 %v770, %v772
    %v774 = vrot.slane %v766, %v773
    %v776 = vunpack.c.l.s4 1934713408
    %v777 = vunpack.c.0.s8 %v776
    %v778 = vlaneseq
    %v779 = vshrl.u32 %v778, 7
    %v780 = vsub.s32 %v777, %v779
    %v781 = vrot.slane %v767, %v780
    %v782 = vcombine.low %v717, %v733
    %v783 = vcombine.high %v717, %v733
    %v785 = vunpack.c.l.s4 1934713408
    %v786 = vunpack.c.0.s8 %v785
    %v787 = vlaneseq
    %v788 = vshrl.u32 %v787, 7
    %v789 = vsub.s32 %v786, %v788
    %v790 = vrot.slane %v782, %v789
    %v792 = vunpack.c.l.s4 1934713408
    %v793 = vunpack.c.0.s8 %v792
    %v794 = vlaneseq
    %v795 = vshrl.u32 %v794, 7
    %v796 = vsub.s32 %v793, %v795
    %v797 = vrot.slane %v783, %v796
    %v798 = vcombine.low %v742, %v758
    %v799 = vcombine.high %v742, %v758
    %v801 = vunpack.c.l.s4 1934713408
    %v802 = vunpack.c.0.s8 %v801
    %v803 = vlaneseq
    %v804 = vshrl.u32 %v803, 7
    %v805 = vsub.s32 %v802, %v804
    %v806 = vrot.slane %v798, %v805
    %v808 = vunpack.c.l.s4 1934713408
    %v809 = vunpack.c.0.s8 %v808
    %v810 = vlaneseq
    %v811 = vshrl.u32 %v810, 7
    %v812 = vsub.s32 %v809, %v811
    %v813 = vrot.slane %v799, %v812
    %v814 = vcombine.low %v749, %v765
    %v815 = vcombine.high %v749, %v765
    %v817 = vunpack.c.l.s4 1934713408
    %v818 = vunpack.c.0.s8 %v817
    %v819 = vlaneseq
    %v820 = vshrl.u32 %v819, 7
    %v821 = vsub.s32 %v818, %v820
    %v822 = vrot.slane %v814, %v821
    %v824 = vunpack.c.l.s4 1934713408
    %v825 = vunpack.c.0.s8 %v824
    %v826 = vlaneseq
    %v827 = vshrl.u32 %v826, 7
    %v828 = vsub.s32 %v825, %v827
    %v829 = vrot.slane %v815, %v828
    %v830 = vcombine.low %v774, %v806
    %v831 = vcombine.high %v774, %v806
    %v832 = vcombine.low %v781, %v813
    %v833 = vcombine.high %v781, %v813
    %v834 = vcombine.low %v790, %v822
    %v835 = vcombine.high %v790, %v822
    %v836 = vcombine.low %v797, %v829
    %v837 = vcombine.high %v797, %v829
    %v838 = vcombine.low %v236, %v611
    %v839 = vcombine.high %v236, %v611
    %v841 = vunpack.c.l.s4 1983009808
    %v842 = vunpack.c.0.s8 %v841
    %v843 = vlaneseq
    %v844 = vshrl.u32 %v843, 7
    %v845 = vsub.s32 %v842, %v844
    %v846 = vrot.slane %v838, %v845
    %v848 = vunpack.c.l.s4 1983009808
    %v849 = vunpack.c.0.s8 %v848
    %v850 = vlaneseq
    %v851 = vshrl.u32 %v850, 7
    %v852 = vsub.s32 %v849, %v851
    %v853 = vrot.slane %v839, %v852
    %v854 = vcombine.low %v605, %v617
    %v855 = vcombine.high %v605, %v617
    %v857 = vunpack.c.l.s4 1983009808
    %v858 = vunpack.c.0.s8 %v857
    %v859 = vlaneseq
    %v860 = vshrl.u32 %v859, 7
    %v861 = vsub.s32 %v858, %v860
    %v862 = vrot.slane %v854, %v861
    %v864 = vunpack.c.l.s4 1983009808
    %v865 = vunpack.c.0.s8 %v864
    %v866 = vlaneseq
    %v867 = vshrl.u32 %v866, 7
    %v868 = vsub.s32 %v865, %v867
    %v869 = vrot.slane %v855, %v868
    %v870 = vcombine.low %v320, %v631
    %v871 = vcombine.high %v320, %v631
    %v873 = vunpack.c.l.s4 1983009808
    %v874 = vunpack.c.0.s8 %v873
    %v875 = vlaneseq
    %v876 = vshrl.u32 %v875, 7
    %v877 = vsub.s32 %v874, %v876
    %v878 = vrot.slane %v870, %v877
    %v880 = vunpack.c.l.s4 1983009808
    %v881 = vunpack.c.0.s8 %v880
    %v882 = vlaneseq
    %v883 = vshrl.u32 %v882, 7
    %v884 = vsub.s32 %v881, %v883
    %v885 = vrot.slane %v871, %v884
    %v886 = vcombine.low %v625, %v637
    %v887 = vcombine.high %v625, %v637
    %v889 = vunpack.c.l.s4 1983009808
    %v890 = vunpack.c.0.s8 %v889
    %v891 = vlaneseq
    %v892 = vshrl.u32 %v891, 7
    %v893 = vsub.s32 %v890, %v892
    %v894 = vrot.slane %v886, %v893
    %v896 = vunpack.c.l.s4 1983009808
    %v897 = vunpack.c.0.s8 %v896
    %v898 = vlaneseq
    %v899 = vshrl.u32 %v898, 7
    %v900 = vsub.s32 %v897, %v899
    %v901 = vrot.slane %v887, %v900
    %v902 = vcombine.low %v846, %v862
    %v903 = vcombine.high %v846, %v862
    %v905 = vunpack.c.l.s4 1934713408
    %v906 = vunpack.c.0.s8 %v905
    %v907 = vlaneseq
    %v908 = vshrl.u32 %v907, 7
    %v909 = vsub.s32 %v906, %v908
    %v910 = vrot.slane %v902, %v909
    %v912 = vunpack.c.l.s4 1934713408
    %v913 = vunpack.c.0.s8 %v912
    %v914 = vlaneseq
    %v915 = vshrl.u32 %v914, 7
    %v916 = vsub.s32 %v913, %v915
    %v917 = vrot.slane %v903, %v916
    %v918 = vcombine.low %v853, %v869
    %v919 = vcombine.high %v853, %v869
    %v921 = vunpack.c.l.s4 1934713408
    %v922 = vunpack.c.0.s8 %v921
    %v923 = vlaneseq
    %v924 = vshrl.u32 %v923, 7
    %v925 = vsub.s32 %v922, %v924
    %v926 = vrot.slane %v918, %v925
    %v928 = vunpack.c.l.s4 1934713408
    %v929 = vunpack.c.0.s8 %v928
    %v930 = vlaneseq
    %v931 = vshrl.u32 %v930, 7
    %v932 = vsub.s32 %v929, %v931
    %v933 = vrot.slane %v919, %v932
    %v934 = vcombine.low %v878, %v894
    %v935 = vcombine.high %v878, %v894
    %v937 = vunpack.c.l.s4 1934713408
    %v938 = vunpack.c.0.s8 %v937
    %v939 = vlaneseq
    %v940 = vshrl.u32 %v939, 7
    %v941 = vsub.s32 %v938, %v940
    %v942 = vrot.slane %v934, %v941
    %v944 = vunpack.c.l.s4 1934713408
    %v945 = vunpack.c.0.s8 %v944
    %v946 = vlaneseq
    %v947 = vshrl.u32 %v946, 7
    %v948 = vsub.s32 %v945, %v947
    %v949 = vrot.slane %v935, %v948
    %v950 = vcombine.low %v885, %v901
    %v951 = vcombine.high %v885, %v901
    %v953 = vunpack.c.l.s4 1934713408
    %v954 = vunpack.c.0.s8 %v953
    %v955 = vlaneseq
    %v956 = vshrl.u32 %v955, 7
    %v957 = vsub.s32 %v954, %v956
    %v958 = vrot.slane %v950, %v957
    %v960 = vunpack.c.l.s4 1934713408
    %v961 = vunpack.c.0.s8 %v960
    %v962 = vlaneseq
    %v963 = vshrl.u32 %v962, 7
    %v964 = vsub.s32 %v961, %v963
    %v965 = vrot.slane %v951, %v964
    %v966 = vcombine.low %v910, %v942
    %v967 = vcombine.high %v910, %v942
    %v968 = vcombine.low %v917, %v949
    %v969 = vcombine.high %v917, %v949
    %v970 = vcombine.low %v926, %v958
    %v971 = vcombine.high %v926, %v958
    %v972 = vcombine.low %v933, %v965
    %v973 = vcombine.high %v933, %v965
    %v974 = vcombine.low %v395, %v651
    %v975 = vcombine.high %v395, %v651
    %v977 = vunpack.c.l.s4 1983009808
    %v978 = vunpack.c.0.s8 %v977
    %v979 = vlaneseq
    %v980 = vshrl.u32 %v979, 7
    %v981 = vsub.s32 %v978, %v980
    %v982 = vrot.slane %v974, %v981
    %v984 = vunpack.c.l.s4 1983009808
    %v985 = vunpack.c.0.s8 %v984
    %v986 = vlaneseq
    %v987 = vshrl.u32 %v986, 7
    %v988 = vsub.s32 %v985, %v987
    %v989 = vrot.slane %v975, %v988
    %v990 = vcombine.low %v645, %v657
    %v991 = vcombine.high %v645, %v657
    %v993 = vunpack.c.l.s4 1983009808
    %v994 = vunpack.c.0.s8 %v993
    %v995 = vlaneseq
    %v996 = vshrl.u32 %v995, 7
    %v997 = vsub.s32 %v994, %v996
    %v998 = vrot.slane %v990, %v997
    %v1000 = vunpack.c.l.s4 1983009808
    %v1001 = vunpack.c.0.s8 %v1000
    %v1002 = vlaneseq
    %v1003 = vshrl.u32 %v1002, 7
    %v1004 = vsub.s32 %v1001, %v1003
    %v1005 = vrot.slane %v991, %v1004
    %v1006 = vcombine.low %v479, %v671
    %v1007 = vcombine.high %v479, %v671
    %v1009 = vunpack.c.l.s4 1983009808
    %v1010 = vunpack.c.0.s8 %v1009
    %v1011 = vlaneseq
    %v1012 = vshrl.u32 %v1011, 7
    %v1013 = vsub.s32 %v1010, %v1012
    %v1014 = vrot.slane %v1006, %v1013
    %v1016 = vunpack.c.l.s4 1983009808
    %v1017 = vunpack.c.0.s8 %v1016
    %v1018 = vlaneseq
    %v1019 = vshrl.u32 %v1018, 7
    %v1020 = vsub.s32 %v1017, %v1019
    %v1021 = vrot.slane %v1007, %v1020
    %v1022 = vcombine.low %v665, %v677
    %v1023 = vcombine.high %v665, %v677
    %v1025 = vunpack.c.l.s4 1983009808
    %v1026 = vunpack.c.0.s8 %v1025
    %v1027 = vlaneseq
    %v1028 = vshrl.u32 %v1027, 7
    %v1029 = vsub.s32 %v1026, %v1028
    %v1030 = vrot.slane %v1022, %v1029
    %v1032 = vunpack.c.l.s4 1983009808
    %v1033 = vunpack.c.0.s8 %v1032
    %v1034 = vlaneseq
    %v1035 = vshrl.u32 %v1034, 7
    %v1036 = vsub.s32 %v1033, %v1035
    %v1037 = vrot.slane %v1023, %v1036
    %v1038 = vcombine.low %v982, %v998
    %v1039 = vcombine.high %v982, %v998
    %v1041 = vunpack.c.l.s4 1934713408
    %v1042 = vunpack.c.0.s8 %v1041
    %v1043 = vlaneseq
    %v1044 = vshrl.u32 %v1043, 7
    %v1045 = vsub.s32 %v1042, %v1044
    %v1046 = vrot.slane %v1038, %v1045
    %v1048 = vunpack.c.l.s4 1934713408
    %v1049 = vunpack.c.0.s8 %v1048
    %v1050 = vlaneseq
    %v1051 = vshrl.u32 %v1050, 7
    %v1052 = vsub.s32 %v1049, %v1051
    %v1053 = vrot.slane %v1039, %v1052
    %v1054 = vcombine.low %v989, %v1005
    %v1055 = vcombine.high %v989, %v1005
    %v1057 = vunpack.c.l.s4 1934713408
    %v1058 = vunpack.c.0.s8 %v1057
    %v1059 = vlaneseq
    %v1060 = vshrl.u32 %v1059, 7
    %v1061 = vsub.s32 %v1058, %v1060
    %v1062 = vrot.slane %v1054, %v1061
    %v1064 = vunpack.c.l.s4 1934713408
    %v1065 = vunpack.c.0.s8 %v1064
    %v1066 = vlaneseq
    %v1067 = vshrl.u32 %v1066, 7
    %v1068 = vsub.s32 %v1065, %v1067
    %v1069 = vrot.slane %v1055, %v1068
    %v1070 = vcombine.low %v1014, %v1030
    %v1071 = vcombine.high %v1014, %v1030
    %v1073 = vunpack.c.l.s4 1934713408
    %v1074 = vunpack.c.0.s8 %v1073
    %v1075 = vlaneseq
    %v1076 = vshrl.u32 %v1075, 7
    %v1077 = vsub.s32 %v1074, %v1076
    %v1078 = vrot.slane %v1070, %v1077
    %v1080 = vunpack.c.l.s4 1934713408
    %v1081 = vunpack.c.0.s8 %v1080
    %v1082 = vlaneseq
    %v1083 = vshrl.u32 %v1082, 7
    %v1084 = vsub.s32 %v1081, %v1083
    %v1085 = vrot.slane %v1071, %v1084
    %v1086 = vcombine.low %v1021, %v1037
    %v1087 = vcombine.high %v1021, %v1037
    %v1089 = vunpack.c.l.s4 1934713408
    %v1090 = vunpack.c.0.s8 %v1089
    %v1091 = vlaneseq
    %v1092 = vshrl.u32 %v1091, 7
    %v1093 = vsub.s32 %v1090, %v1092
    %v1094 = vrot.slane %v1086, %v1093
    %v1096 = vunpack.c.l.s4 1934713408
    %v1097 = vunpack.c.0.s8 %v1096
    %v1098 = vlaneseq
    %v1099 = vshrl.u32 %v1098, 7
    %v1100 = vsub.s32 %v1097, %v1099
    %v1101 = vrot.slane %v1087, %v1100
    %v1102 = vcombine.low %v1046, %v1078
    %v1103 = vcombine.high %v1046, %v1078
    %v1104 = vcombine.low %v1053, %v1085
    %v1105 = vcombine.high %v1053, %v1085
    %v1106 = vcombine.low %v1062, %v1094
    %v1107 = vcombine.high %v1062, %v1094
    %v1108 = vcombine.low %v1069, %v1101
    %v1109 = vcombine.high %v1069, %v1101
    %v1110 = vcombine.low %v554, %v691
    %v1111 = vcombine.high %v554, %v691
    %v1113 = vunpack.c.l.s4 1983009808
    %v1114 = vunpack.c.0.s8 %v1113
    %v1115 = vlaneseq
    %v1116 = vshrl.u32 %v1115, 7
    %v1117 = vsub.s32 %v1114, %v1116
    %v1118 = vrot.slane %v1110, %v1117
    %v1120 = vunpack.c.l.s4 1983009808
    %v1121 = vunpack.c.0.s8 %v1120
    %v1122 = vlaneseq
    %v1123 = vshrl.u32 %v1122, 7
    %v1124 = vsub.s32 %v1121, %v1123
    %v1125 = vrot.slane %v1111, %v1124
    %v1126 = vcombine.low %v685, %v697
    %v1127 = vcombine.high %v685, %v697
    %v1129 = vunpack.c.l.s4 1983009808
    %v1130 = vunpack.c.0.s8 %v1129
    %v1131 = vlaneseq
    %v1132 = vshrl.u32 %v1131, 7
    %v1133 = vsub.s32 %v1130, %v1132
    %v1134 = vrot.slane %v1126, %v1133
    %v1136 = vunpack.c.l.s4 1983009808
    %v1137 = vunpack.c.0.s8 %v1136
    %v1138 = vlaneseq
    %v1139 = vshrl.u32 %v1138, 7
    %v1140 = vsub.s32 %v1137, %v1139
    %v1141 = vrot.slane %v1127, %v1140
    %v1142 = vcombine.low %v1118, %v1134
    %v1143 = vcombine.high %v1118, %v1134
    %v1145 = vunpack.c.l.s4 1934713408
    %v1146 = vunpack.c.0.s8 %v1145
    %v1147 = vlaneseq
    %v1148 = vshrl.u32 %v1147, 7
    %v1149 = vsub.s32 %v1146, %v1148
    %v1150 = vrot.slane %v1142, %v1149
    %v1152 = vunpack.c.l.s4 1934713408
    %v1153 = vunpack.c.0.s8 %v1152
    %v1154 = vlaneseq
    %v1155 = vshrl.u32 %v1154, 7
    %v1156 = vsub.s32 %v1153, %v1155
    %v1157 = vrot.slane %v1143, %v1156
    %v1158 = vcombine.low %v1125, %v1141
    %v1159 = vcombine.high %v1125, %v1141
    %v1161 = vunpack.c.l.s4 1934713408
    %v1162 = vunpack.c.0.s8 %v1161
    %v1163 = vlaneseq
    %v1164 = vshrl.u32 %v1163, 7
    %v1165 = vsub.s32 %v1162, %v1164
    %v1166 = vrot.slane %v1158, %v1165
    %v1168 = vunpack.c.l.s4 1934713408
    %v1169 = vunpack.c.0.s8 %v1168
    %v1170 = vlaneseq
    %v1171 = vshrl.u32 %v1170, 7
    %v1172 = vsub.s32 %v1169, %v1171
    %v1173 = vrot.slane %v1159, %v1172
    %v1174 = vcombine.high %v1150, 0.0
    %v1175 = vcombine.high %v1157, 0.0
    %v1176 = vcombine.high %v1166, 0.0
    %v1177 = vcombine.high %v1173, 0.0
    %v1178 = vcombine.low %v85, %v573
    %v1179 = vcombine.high %v85, %v573
    %v1181 = vunpack.c.l.s4 1983009808
    %v1182 = vunpack.c.0.s8 %v1181
    %v1183 = vlaneseq
    %v1184 = vshrl.u32 %v1183, 7
    %v1185 = vsub.s32 %v1182, %v1184
    %v1186 = vrot.slane %v1178, %v1185
    %v1188 = vunpack.c.l.s4 1983009808
    %v1189 = vunpack.c.0.s8 %v1188
    %v1190 = vlaneseq
    %v1191 = vshrl.u32 %v1190, 7
    %v1192 = vsub.s32 %v1189, %v1191
    %v1193 = vrot.slane %v1179, %v1192
    %v1194 = vcombine.low %v567, %v579
    %v1195 = vcombine.high %v567, %v579
    %v1197 = vunpack.c.l.s4 1983009808
    %v1198 = vunpack.c.0.s8 %v1197
    %v1199 = vlaneseq
    %v1200 = vshrl.u32 %v1199, 7
    %v1201 = vsub.s32 %v1198, %v1200
    %v1202 = vrot.slane %v1194, %v1201
    %v1204 = vunpack.c.l.s4 1983009808
    %v1205 = vunpack.c.0.s8 %v1204
    %v1206 = vlaneseq
    %v1207 = vshrl.u32 %v1206, 7
    %v1208 = vsub.s32 %v1205, %v1207
    %v1209 = vrot.slane %v1195, %v1208
    %v1210 = vcombine.low %v166, %v593
    %v1211 = vcombine.high %v166, %v593
    %v1213 = vunpack.c.l.s4 1983009808
    %v1214 = vunpack.c.0.s8 %v1213
    %v1215 = vlaneseq
    %v1216 = vshrl.u32 %v1215, 7
    %v1217 = vsub.s32 %v1214, %v1216
    %v1218 = vrot.slane %v1210, %v1217
    %v1220 = vunpack.c.l.s4 1983009808
    %v1221 = vunpack.c.0.s8 %v1220
    %v1222 = vlaneseq
    %v1223 = vshrl.u32 %v1222, 7
    %v1224 = vsub.s32 %v1221, %v1223
    %v1225 = vrot.slane %v1211, %v1224
    %v1226 = vcombine.low %v587, %v599
    %v1227 = vcombine.high %v587, %v599
    %v1229 = vunpack.c.l.s4 1983009808
    %v1230 = vunpack.c.0.s8 %v1229
    %v1231 = vlaneseq
    %v1232 = vshrl.u32 %v1231, 7
    %v1233 = vsub.s32 %v1230, %v1232
    %v1234 = vrot.slane %v1226, %v1233
    %v1236 = vunpack.c.l.s4 1983009808
    %v1237 = vunpack.c.0.s8 %v1236
    %v1238 = vlaneseq
    %v1239 = vshrl.u32 %v1238, 7
    %v1240 = vsub.s32 %v1237, %v1239
    %v1241 = vrot.slane %v1227, %v1240
    %v1242 = vcombine.low %v1186, %v1202
    %v1243 = vcombine.high %v1186, %v1202
    %v1245 = vunpack.c.l.s4 1934713408
    %v1246 = vunpack.c.0.s8 %v1245
    %v1247 = vlaneseq
    %v1248 = vshrl.u32 %v1247, 7
    %v1249 = vsub.s32 %v1246, %v1248
    %v1250 = vrot.slane %v1242, %v1249
    %v1252 = vunpack.c.l.s4 1934713408
    %v1253 = vunpack.c.0.s8 %v1252
    %v1254 = vlaneseq
    %v1255 = vshrl.u32 %v1254, 7
    %v1256 = vsub.s32 %v1253, %v1255
    %v1257 = vrot.slane %v1243, %v1256
    %v1258 = vcombine.low %v1193, %v1209
    %v1259 = vcombine.high %v1193, %v1209
    %v1261 = vunpack.c.l.s4 1934713408
    %v1262 = vunpack.c.0.s8 %v1261
    %v1263 = vlaneseq
    %v1264 = vshrl.u32 %v1263, 7
    %v1265 = vsub.s32 %v1262, %v1264
    %v1266 = vrot.slane %v1258, %v1265
    %v1268 = vunpack.c.l.s4 1934713408
    %v1269 = vunpack.c.0.s8 %v1268
    %v1270 = vlaneseq
    %v1271 = vshrl.u32 %v1270, 7
    %v1272 = vsub.s32 %v1269, %v1271
    %v1273 = vrot.slane %v1259, %v1272
    %v1274 = vcombine.low %v1218, %v1234
    %v1275 = vcombine.high %v1218, %v1234
    %v1277 = vunpack.c.l.s4 1934713408
    %v1278 = vunpack.c.0.s8 %v1277
    %v1279 = vlaneseq
    %v1280 = vshrl.u32 %v1279, 7
    %v1281 = vsub.s32 %v1278, %v1280
    %v1282 = vrot.slane %v1274, %v1281
    %v1284 = vunpack.c.l.s4 1934713408
    %v1285 = vunpack.c.0.s8 %v1284
    %v1286 = vlaneseq
    %v1287 = vshrl.u32 %v1286, 7
    %v1288 = vsub.s32 %v1285, %v1287
    %v1289 = vrot.slane %v1275, %v1288
    %v1290 = vcombine.low %v1225, %v1241
    %v1291 = vcombine.high %v1225, %v1241
    %v1293 = vunpack.c.l.s4 1934713408
    %v1294 = vunpack.c.0.s8 %v1293
    %v1295 = vlaneseq
    %v1296 = vshrl.u32 %v1295, 7
    %v1297 = vsub.s32 %v1294, %v1296
    %v1298 = vrot.slane %v1290, %v1297
    %v1300 = vunpack.c.l.s4 1934713408
    %v1301 = vunpack.c.0.s8 %v1300
    %v1302 = vlaneseq
    %v1303 = vshrl.u32 %v1302, 7
    %v1304 = vsub.s32 %v1301, %v1303
    %v1305 = vrot.slane %v1291, %v1304
    %v1306 = vcombine.low %v1250, %v1282
    %v1307 = vcombine.high %v1250, %v1282
    %v1308 = vcombine.low %v1257, %v1289
    %v1309 = vcombine.high %v1257, %v1289
    %v1310 = vcombine.low %v1266, %v1298
    %v1311 = vcombine.high %v1266, %v1298
    %v1312 = vcombine.low %v1273, %v1305
    %v1313 = vcombine.high %v1273, %v1305
    %v1314 = vcombine.low %v241, %v613
    %v1315 = vcombine.high %v241, %v613
    %v1317 = vunpack.c.l.s4 1983009808
    %v1318 = vunpack.c.0.s8 %v1317
    %v1319 = vlaneseq
    %v1320 = vshrl.u32 %v1319, 7
    %v1321 = vsub.s32 %v1318, %v1320
    %v1322 = vrot.slane %v1314, %v1321
    %v1324 = vunpack.c.l.s4 1983009808
    %v1325 = vunpack.c.0.s8 %v1324
    %v1326 = vlaneseq
    %v1327 = vshrl.u32 %v1326, 7
    %v1328 = vsub.s32 %v1325, %v1327
    %v1329 = vrot.slane %v1315, %v1328
    %v1330 = vcombine.low %v607, %v619
    %v1331 = vcombine.high %v607, %v619
    %v1333 = vunpack.c.l.s4 1983009808
    %v1334 = vunpack.c.0.s8 %v1333
    %v1335 = vlaneseq
    %v1336 = vshrl.u32 %v1335, 7
    %v1337 = vsub.s32 %v1334, %v1336
    %v1338 = vrot.slane %v1330, %v1337
    %v1340 = vunpack.c.l.s4 1983009808
    %v1341 = vunpack.c.0.s8 %v1340
    %v1342 = vlaneseq
    %v1343 = vshrl.u32 %v1342, 7
    %v1344 = vsub.s32 %v1341, %v1343
    %v1345 = vrot.slane %v1331, %v1344
    %v1346 = vcombine.low %v325, %v633
    %v1347 = vcombine.high %v325, %v633
    %v1349 = vunpack.c.l.s4 1983009808
    %v1350 = vunpack.c.0.s8 %v1349
    %v1351 = vlaneseq
    %v1352 = vshrl.u32 %v1351, 7
    %v1353 = vsub.s32 %v1350, %v1352
    %v1354 = vrot.slane %v1346, %v1353
    %v1356 = vunpack.c.l.s4 1983009808
    %v1357 = vunpack.c.0.s8 %v1356
    %v1358 = vlaneseq
    %v1359 = vshrl.u32 %v1358, 7
    %v1360 = vsub.s32 %v1357, %v1359
    %v1361 = vrot.slane %v1347, %v1360
    %v1362 = vcombine.low %v627, %v639
    %v1363 = vcombine.high %v627, %v639
    %v1365 = vunpack.c.l.s4 1983009808
    %v1366 = vunpack.c.0.s8 %v1365
    %v1367 = vlaneseq
    %v1368 = vshrl.u32 %v1367, 7
    %v1369 = vsub.s32 %v1366, %v1368
    %v1370 = vrot.slane %v1362, %v1369
    %v1372 = vunpack.c.l.s4 1983009808
    %v1373 = vunpack.c.0.s8 %v1372
    %v1374 = vlaneseq
    %v1375 = vshrl.u32 %v1374, 7
    %v1376 = vsub.s32 %v1373, %v1375
    %v1377 = vrot.slane %v1363, %v1376
    %v1378 = vcombine.low %v1322, %v1338
    %v1379 = vcombine.high %v1322, %v1338
    %v1381 = vunpack.c.l.s4 1934713408
    %v1382 = vunpack.c.0.s8 %v1381
    %v1383 = vlaneseq
    %v1384 = vshrl.u32 %v1383, 7
    %v1385 = vsub.s32 %v1382, %v1384
    %v1386 = vrot.slane %v1378, %v1385
    %v1388 = vunpack.c.l.s4 1934713408
    %v1389 = vunpack.c.0.s8 %v1388
    %v1390 = vlaneseq
    %v1391 = vshrl.u32 %v1390, 7
    %v1392 = vsub.s32 %v1389, %v1391
    %v1393 = vrot.slane %v1379, %v1392
    %v1394 = vcombine.low %v1329, %v1345
    %v1395 = vcombine.high %v1329, %v1345
    %v1397 = vunpack.c.l.s4 1934713408
    %v1398 = vunpack.c.0.s8 %v1397
    %v1399 = vlaneseq
    %v1400 = vshrl.u32 %v1399, 7
    %v1401 = vsub.s32 %v1398, %v1400
    %v1402 = vrot.slane %v1394, %v1401
    %v1404 = vunpack.c.l.s4 1934713408
    %v1405 = vunpack.c.0.s8 %v1404
    %v1406 = vlaneseq
    %v1407 = vshrl.u32 %v1406, 7
    %v1408 = vsub.s32 %v1405, %v1407
    %v1409 = vrot.slane %v1395, %v1408
    %v1410 = vcombine.low %v1354, %v1370
    %v1411 = vcombine.high %v1354, %v1370
    %v1413 = vunpack.c.l.s4 1934713408
    %v1414 = vunpack.c.0.s8 %v1413
    %v1415 = vlaneseq
    %v1416 = vshrl.u32 %v1415, 7
    %v1417 = vsub.s32 %v1414, %v1416
    %v1418 = vrot.slane %v1410, %v1417
    %v1420 = vunpack.c.l.s4 1934713408
    %v1421 = vunpack.c.0.s8 %v1420
    %v1422 = vlaneseq
    %v1423 = vshrl.u32 %v1422, 7
    %v1424 = vsub.s32 %v1421, %v1423
    %v1425 = vrot.slane %v1411, %v1424
    %v1426 = vcombine.low %v1361, %v1377
    %v1427 = vcombine.high %v1361, %v1377
    %v1429 = vunpack.c.l.s4 1934713408
    %v1430 = vunpack.c.0.s8 %v1429
    %v1431 = vlaneseq
    %v1432 = vshrl.u32 %v1431, 7
    %v1433 = vsub.s32 %v1430, %v1432
    %v1434 = vrot.slane %v1426, %v1433
    %v1436 = vunpack.c.l.s4 1934713408
    %v1437 = vunpack.c.0.s8 %v1436
    %v1438 = vlaneseq
    %v1439 = vshrl.u32 %v1438, 7
    %v1440 = vsub.s32 %v1437, %v1439
    %v1441 = vrot.slane %v1427, %v1440
    %v1442 = vcombine.low %v1386, %v1418
    %v1443 = vcombine.high %v1386, %v1418
    %v1444 = vcombine.low %v1393, %v1425
    %v1445 = vcombine.high %v1393, %v1425
    %v1446 = vcombine.low %v1402, %v1434
    %v1447 = vcombine.high %v1402, %v1434
    %v1448 = vcombine.low %v1409, %v1441
    %v1449 = vcombine.high %v1409, %v1441
    %v1450 = vcombine.low %v400, %v653
    %v1451 = vcombine.high %v400, %v653
    %v1453 = vunpack.c.l.s4 1983009808
    %v1454 = vunpack.c.0.s8 %v1453
    %v1455 = vlaneseq
    %v1456 = vshrl.u32 %v1455, 7
    %v1457 = vsub.s32 %v1454, %v1456
    %v1458 = vrot.slane %v1450, %v1457
    %v1460 = vunpack.c.l.s4 1983009808
    %v1461 = vunpack.c.0.s8 %v1460
    %v1462 = vlaneseq
    %v1463 = vshrl.u32 %v1462, 7
    %v1464 = vsub.s32 %v1461, %v1463
    %v1465 = vrot.slane %v1451, %v1464
    %v1466 = vcombine.low %v647, %v659
    %v1467 = vcombine.high %v647, %v659
    %v1469 = vunpack.c.l.s4 1983009808
    %v1470 = vunpack.c.0.s8 %v1469
    %v1471 = vlaneseq
    %v1472 = vshrl.u32 %v1471, 7
    %v1473 = vsub.s32 %v1470, %v1472
    %v1474 = vrot.slane %v1466, %v1473
    %v1476 = vunpack.c.l.s4 1983009808
    %v1477 = vunpack.c.0.s8 %v1476
    %v1478 = vlaneseq
    %v1479 = vshrl.u32 %v1478, 7
    %v1480 = vsub.s32 %v1477, %v1479
    %v1481 = vrot.slane %v1467, %v1480
    %v1482 = vcombine.low %v484, %v673
    %v1483 = vcombine.high %v484, %v673
    %v1485 = vunpack.c.l.s4 1983009808
    %v1486 = vunpack.c.0.s8 %v1485
    %v1487 = vlaneseq
    %v1488 = vshrl.u32 %v1487, 7
    %v1489 = vsub.s32 %v1486, %v1488
    %v1490 = vrot.slane %v1482, %v1489
    %v1492 = vunpack.c.l.s4 1983009808
    %v1493 = vunpack.c.0.s8 %v1492
    %v1494 = vlaneseq
    %v1495 = vshrl.u32 %v1494, 7
    %v1496 = vsub.s32 %v1493, %v1495
    %v1497 = vrot.slane %v1483, %v1496
    %v1498 = vcombine.low %v667, %v679
    %v1499 = vcombine.high %v667, %v679
    %v1501 = vunpack.c.l.s4 1983009808
    %v1502 = vunpack.c.0.s8 %v1501
    %v1503 = vlaneseq
    %v1504 = vshrl.u32 %v1503, 7
    %v1505 = vsub.s32 %v1502, %v1504
    %v1506 = vrot.slane %v1498, %v1505
    %v1508 = vunpack.c.l.s4 1983009808
    %v1509 = vunpack.c.0.s8 %v1508
    %v1510 = vlaneseq
    %v1511 = vshrl.u32 %v1510, 7
    %v1512 = vsub.s32 %v1509, %v1511
    %v1513 = vrot.slane %v1499, %v1512
    %v1514 = vcombine.low %v1458, %v1474
    %v1515 = vcombine.high %v1458, %v1474
    %v1517 = vunpack.c.l.s4 1934713408
    %v1518 = vunpack.c.0.s8 %v1517
    %v1519 = vlaneseq
    %v1520 = vshrl.u32 %v1519, 7
    %v1521 = vsub.s32 %v1518, %v1520
    %v1522 = vrot.slane %v1514, %v1521
    %v1524 = vunpack.c.l.s4 1934713408
    %v1525 = vunpack.c.0.s8 %v1524
    %v1526 = vlaneseq
    %v1527 = vshrl.u32 %v1526, 7
    %v1528 = vsub.s32 %v1525, %v1527
    %v1529 = vrot.slane %v1515, %v1528
    %v1530 = vcombine.low %v1465, %v1481
    %v1531 = vcombine.high %v1465, %v1481
    %v1533 = vunpack.c.l.s4 1934713408
    %v1534 = vunpack.c.0.s8 %v1533
    %v1535 = vlaneseq
    %v1536 = vshrl.u32 %v1535, 7
    %v1537 = vsub.s32 %v1534, %v1536
    %v1538 = vrot.slane %v1530, %v1537
    %v1540 = vunpack.c.l.s4 1934713408
    %v1541 = vunpack.c.0.s8 %v1540
    %v1542 = vlaneseq
    %v1543 = vshrl.u32 %v1542, 7
    %v1544 = vsub.s32 %v1541, %v1543
    %v1545 = vrot.slane %v1531, %v1544
    %v1546 = vcombine.low %v1490, %v1506
    %v1547 = vcombine.high %v1490, %v1506
    %v1549 = vunpack.c.l.s4 1934713408
    %v1550 = vunpack.c.0.s8 %v1549
    %v1551 = vlaneseq
    %v1552 = vshrl.u32 %v1551, 7
    %v1553 = vsub.s32 %v1550, %v1552
    %v1554 = vrot.slane %v1546, %v1553
    %v1556 = vunpack.c.l.s4 1934713408
    %v1557 = vunpack.c.0.s8 %v1556
    %v1558 = vlaneseq
    %v1559 = vshrl.u32 %v1558, 7
    %v1560 = vsub.s32 %v1557, %v1559
    %v1561 = vrot.slane %v1547, %v1560
    %v1562 = vcombine.low %v1497, %v1513
    %v1563 = vcombine.high %v1497, %v1513
    %v1565 = vunpack.c.l.s4 1934713408
    %v1566 = vunpack.c.0.s8 %v1565
    %v1567 = vlaneseq
    %v1568 = vshrl.u32 %v1567, 7
    %v1569 = vsub.s32 %v1566, %v1568
    %v1570 = vrot.slane %v1562, %v1569
    %v1572 = vunpack.c.l.s4 1934713408
    %v1573 = vunpack.c.0.s8 %v1572
    %v1574 = vlaneseq
    %v1575 = vshrl.u32 %v1574, 7
    %v1576 = vsub.s32 %v1573, %v1575
    %v1577 = vrot.slane %v1563, %v1576
    %v1578 = vcombine.low %v1522, %v1554
    %v1579 = vcombine.high %v1522, %v1554
    %v1580 = vcombine.low %v1529, %v1561
    %v1581 = vcombine.high %v1529, %v1561
    %v1582 = vcombine.low %v1538, %v1570
    %v1583 = vcombine.high %v1538, %v1570
    %v1584 = vcombine.low %v1545, %v1577
    %v1585 = vcombine.high %v1545, %v1577
    %v1586 = vcombine.low %v559, %v693
    %v1587 = vcombine.high %v559, %v693
    %v1589 = vunpack.c.l.s4 1983009808
    %v1590 = vunpack.c.0.s8 %v1589
    %v1591 = vlaneseq
    %v1592 = vshrl.u32 %v1591, 7
    %v1593 = vsub.s32 %v1590, %v1592
    %v1594 = vrot.slane %v1586, %v1593
    %v1596 = vunpack.c.l.s4 1983009808
    %v1597 = vunpack.c.0.s8 %v1596
    %v1598 = vlaneseq
    %v1599 = vshrl.u32 %v1598, 7
    %v1600 = vsub.s32 %v1597, %v1599
    %v1601 = vrot.slane %v1587, %v1600
    %v1602 = vcombine.low %v687, %v699
    %v1603 = vcombine.high %v687, %v699
    %v1605 = vunpack.c.l.s4 1983009808
    %v1606 = vunpack.c.0.s8 %v1605
    %v1607 = vlaneseq
    %v1608 = vshrl.u32 %v1607, 7
    %v1609 = vsub.s32 %v1606, %v1608
    %v1610 = vrot.slane %v1602, %v1609
    %v1612 = vunpack.c.l.s4 1983009808
    %v1613 = vunpack.c.0.s8 %v1612
    %v1614 = vlaneseq
    %v1615 = vshrl.u32 %v1614, 7
    %v1616 = vsub.s32 %v1613, %v1615
    %v1617 = vrot.slane %v1603, %v1616
    %v1618 = vcombine.low %v1594, %v1610
    %v1619 = vcombine.high %v1594, %v1610
    %v1621 = vunpack.c.l.s4 1934713408
    %v1622 = vunpack.c.0.s8 %v1621
    %v1623 = vlaneseq
    %v1624 = vshrl.u32 %v1623, 7
    %v1625 = vsub.s32 %v1622, %v1624
    %v1626 = vrot.slane %v1618, %v1625
    %v1628 = vunpack.c.l.s4 1934713408
    %v1629 = vunpack.c.0.s8 %v1628
    %v1630 = vlaneseq
    %v1631 = vshrl.u32 %v1630, 7
    %v1632 = vsub.s32 %v1629, %v1631
    %v1633 = vrot.slane %v1619, %v1632
    %v1634 = vcombine.low %v1601, %v1617
    %v1635 = vcombine.high %v1601, %v1617
    %v1637 = vunpack.c.l.s4 1934713408
    %v1638 = vunpack.c.0.s8 %v1637
    %v1639 = vlaneseq
    %v1640 = vshrl.u32 %v1639, 7
    %v1641 = vsub.s32 %v1638, %v1640
    %v1642 = vrot.slane %v1634, %v1641
    %v1644 = vunpack.c.l.s4 1934713408
    %v1645 = vunpack.c.0.s8 %v1644
    %v1646 = vlaneseq
    %v1647 = vshrl.u32 %v1646, 7
    %v1648 = vsub.s32 %v1645, %v1647
    %v1649 = vrot.slane %v1635, %v1648
    %v1650 = vcombine.high %v1626, 0.0
    %v1651 = vcombine.high %v1633, 0.0
    %v1652 = vcombine.high %v1642, 0.0
    %v1653 = vcombine.high %v1649, 0.0
    %1658 = vrot.lane.b32.xlu0 %v831, 16
    %v1659 = vpop.permute.xlu0 %1658
    %1660 = vrot.lane.b32.xlu0 %v967, 16
    %v1661 = vpop.permute.xlu0 %1660
    %1662 = vrot.lane.b32.xlu0 %v1103, 16
    %v1663 = vpop.permute.xlu0 %1662
    %1664 = vrot.lane.b32.xlu0 %v1174, 16
    %v1665 = vpop.permute.xlu0 %1664
    %1674 = vrot.lane.b32.xlu0 %v832, 32
    %v1675 = vpop.permute.xlu0 %1674
    %1676 = vrot.lane.b32.xlu0 %v968, 32
    %v1677 = vpop.permute.xlu0 %1676
    %1678 = vrot.lane.b32.xlu0 %v1104, 32
    %v1679 = vpop.permute.xlu0 %1678
    %1680 = vrot.lane.b32.xlu0 %v1157, 32
    %v1681 = vpop.permute.xlu0 %1680
    %1690 = vrot.lane.b32.xlu0 %v833, 48
    %v1691 = vpop.permute.xlu0 %1690
    %1692 = vrot.lane.b32.xlu0 %v969, 48
    %v1693 = vpop.permute.xlu0 %1692
    %1694 = vrot.lane.b32.xlu0 %v1105, 48
    %v1695 = vpop.permute.xlu0 %1694
    %1696 = vrot.lane.b32.xlu0 %v1175, 48
    %v1697 = vpop.permute.xlu0 %1696
    %1706 = vrot.lane.b32.xlu0 %v834, 64
    %v1707 = vpop.permute.xlu0 %1706
    %1708 = vrot.lane.b32.xlu0 %v970, 64
    %v1709 = vpop.permute.xlu0 %1708
    %1710 = vrot.lane.b32.xlu0 %v1106, 64
    %v1711 = vpop.permute.xlu0 %1710
    %1712 = vrot.lane.b32.xlu0 %v1166, 64
    %v1713 = vpop.permute.xlu0 %1712
    %1722 = vrot.lane.b32.xlu0 %v835, 80
    %v1723 = vpop.permute.xlu0 %1722
    %1724 = vrot.lane.b32.xlu0 %v971, 80
    %v1725 = vpop.permute.xlu0 %1724
    %1726 = vrot.lane.b32.xlu0 %v1107, 80
    %v1727 = vpop.permute.xlu0 %1726
    %1728 = vrot.lane.b32.xlu0 %v1176, 80
    %v1729 = vpop.permute.xlu0 %1728
    %1738 = vrot.lane.b32.xlu0 %v836, 96
    %v1739 = vpop.permute.xlu0 %1738
    %1740 = vrot.lane.b32.xlu0 %v972, 96
    %v1741 = vpop.permute.xlu0 %1740
    %1742 = vrot.lane.b32.xlu0 %v1108, 96
    %v1743 = vpop.permute.xlu0 %1742
    %1744 = vrot.lane.b32.xlu0 %v1173, 96
    %v1745 = vpop.permute.xlu0 %1744
    %1754 = vrot.lane.b32.xlu0 %v837, 112
    %v1755 = vpop.permute.xlu0 %1754
    %1756 = vrot.lane.b32.xlu0 %v973, 112
    %v1757 = vpop.permute.xlu0 %1756
    %1758 = vrot.lane.b32.xlu0 %v1109, 112
    %v1759 = vpop.permute.xlu0 %1758
    %1760 = vrot.lane.b32.xlu0 %v1177, 112
    %v1761 = vpop.permute.xlu0 %1760
    %1770 = vrot.lane.b32.xlu0 %v1307, 16
    %v1771 = vpop.permute.xlu0 %1770
    %1772 = vrot.lane.b32.xlu0 %v1443, 16
    %v1773 = vpop.permute.xlu0 %1772
    %1774 = vrot.lane.b32.xlu0 %v1579, 16
    %v1775 = vpop.permute.xlu0 %1774
    %1776 = vrot.lane.b32.xlu0 %v1650, 16
    %v1777 = vpop.permute.xlu0 %1776
    %1786 = vrot.lane.b32.xlu0 %v1308, 32
    %v1787 = vpop.permute.xlu0 %1786
    %1788 = vrot.lane.b32.xlu0 %v1444, 32
    %v1789 = vpop.permute.xlu0 %1788
    %1790 = vrot.lane.b32.xlu0 %v1580, 32
    %v1791 = vpop.permute.xlu0 %1790
    %1792 = vrot.lane.b32.xlu0 %v1633, 32
    %v1793 = vpop.permute.xlu0 %1792
    %1802 = vrot.lane.b32.xlu0 %v1309, 48
    %v1803 = vpop.permute.xlu0 %1802
    %1804 = vrot.lane.b32.xlu0 %v1445, 48
    %v1805 = vpop.permute.xlu0 %1804
    %1806 = vrot.lane.b32.xlu0 %v1581, 48
    %v1807 = vpop.permute.xlu0 %1806
    %1808 = vrot.lane.b32.xlu0 %v1651, 48
    %v1809 = vpop.permute.xlu0 %1808
    %1818 = vrot.lane.b32.xlu0 %v1310, 64
    %v1819 = vpop.permute.xlu0 %1818
    %1820 = vrot.lane.b32.xlu0 %v1446, 64
    %v1821 = vpop.permute.xlu0 %1820
    %1822 = vrot.lane.b32.xlu0 %v1582, 64
    %v1823 = vpop.permute.xlu0 %1822
    %1824 = vrot.lane.b32.xlu0 %v1642, 64
    %v1825 = vpop.permute.xlu0 %1824
    %1834 = vrot.lane.b32.xlu0 %v1311, 80
    %v1835 = vpop.permute.xlu0 %1834
    %1836 = vrot.lane.b32.xlu0 %v1447, 80
    %v1837 = vpop.permute.xlu0 %1836
    %1838 = vrot.lane.b32.xlu0 %v1583, 80
    %v1839 = vpop.permute.xlu0 %1838
    %1840 = vrot.lane.b32.xlu0 %v1652, 80
    %v1841 = vpop.permute.xlu0 %1840
    %1850 = vrot.lane.b32.xlu0 %v1312, 96
    %v1851 = vpop.permute.xlu0 %1850
    %1852 = vrot.lane.b32.xlu0 %v1448, 96
    %v1853 = vpop.permute.xlu0 %1852
    %1854 = vrot.lane.b32.xlu0 %v1584, 96
    %v1855 = vpop.permute.xlu0 %1854
    %1856 = vrot.lane.b32.xlu0 %v1649, 96
    %v1857 = vpop.permute.xlu0 %1856
    %1866 = vrot.lane.b32.xlu0 %v1313, 112
    %v1867 = vpop.permute.xlu0 %1866
    %1868 = vrot.lane.b32.xlu0 %v1449, 112
    %v1869 = vpop.permute.xlu0 %1868
    %1870 = vrot.lane.b32.xlu0 %v1585, 112
    %v1871 = vpop.permute.xlu0 %1870
    %1872 = vrot.lane.b32.xlu0 %v1653, 112
    %v1873 = vpop.permute.xlu0 %1872
    %v1878 = vsel %vm77, %v830, %v1659
    %v1879 = vsel %vm77, %v966, %v1661
    %v1880 = vsel %vm77, %v1102, %v1663
    %v1881 = vsel %vm77, %v1150, %v1665
    %v1882 = vsel %vm80, %v1878, %v1675
    %v1883 = vsel %vm80, %v1879, %v1677
    %v1884 = vsel %vm80, %v1880, %v1679
    %v1885 = vsel %vm80, %v1881, %v1681
    %v1886 = vsel %vm83, %v1882, %v1691
    %v1887 = vsel %vm83, %v1883, %v1693
    %v1888 = vsel %vm83, %v1884, %v1695
    %v1889 = vsel %vm83, %v1885, %v1697
    %vm1890 = vcmask 523264
    %v1891 = vsel %vm1890, %v1886, %v1707
    %v1892 = vsel %vm1890, %v1887, %v1709
    %v1893 = vsel %vm1890, %v1888, %v1711
    %v1894 = vsel %vm1890, %v1889, %v1713
    %vm1895 = vcmask 654336
    %v1896 = vsel %vm1895, %v1891, %v1723
    %v1897 = vsel %vm1895, %v1892, %v1725
    %v1898 = vsel %vm1895, %v1893, %v1727
    %v1899 = vsel %vm1895, %v1894, %v1729
    %vm1900 = vcmask 785408
    %v1901 = vsel %vm1900, %v1896, %v1739
    %v1902 = vsel %vm1900, %v1897, %v1741
    %v1903 = vsel %vm1900, %v1898, %v1743
    %v1904 = vsel %vm1900, %v1899, %v1745
    %vm1905 = vcmask 916480
    %v1906 = vsel %vm1905, %v1901, %v1755
    %v1907 = vsel %vm1905, %v1902, %v1757
    %v1908 = vsel %vm1905, %v1903, %v1759
    %v1909 = vsel %vm1905, %v1904, %v1761
    %v1910 = vsel %vm77, %v1306, %v1771
    %v1911 = vsel %vm77, %v1442, %v1773
    %v1912 = vsel %vm77, %v1578, %v1775
    %v1913 = vsel %vm77, %v1626, %v1777
    %v1914 = vsel %vm80, %v1910, %v1787
    %v1915 = vsel %vm80, %v1911, %v1789
    %v1916 = vsel %vm80, %v1912, %v1791
    %v1917 = vsel %vm80, %v1913, %v1793
    %v1918 = vsel %vm83, %v1914, %v1803
    %v1919 = vsel %vm83, %v1915, %v1805
    %v1920 = vsel %vm83, %v1916, %v1807
    %v1921 = vsel %vm83, %v1917, %v1809
    %v1922 = vsel %vm1890, %v1918, %v1819
    %v1923 = vsel %vm1890, %v1919, %v1821
    %v1924 = vsel %vm1890, %v1920, %v1823
    %v1925 = vsel %vm1890, %v1921, %v1825
    %v1926 = vsel %vm1895, %v1922, %v1835
    %v1927 = vsel %vm1895, %v1923, %v1837
    %v1928 = vsel %vm1895, %v1924, %v1839
    %v1929 = vsel %vm1895, %v1925, %v1841
    %v1930 = vsel %vm1900, %v1926, %v1851
    %v1931 = vsel %vm1900, %v1927, %v1853
    %v1932 = vsel %vm1900, %v1928, %v1855
    %v1933 = vsel %vm1900, %v1929, %v1857
    %v1934 = vsel %vm1905, %v1930, %v1867
    %v1935 = vsel %vm1905, %v1931, %v1869
    %v1936 = vsel %vm1905, %v1932, %v1871
    %v1937 = vsel %vm1905, %v1933, %v1873
    %v1938 = vld [vmem:[%s2] sm:$0xff]
    %v1939 = vld [vmem:[%s2 + $0x8] sm:$0xff]
    %v1940 = vld [vmem:[%s2 + $0x10] sm:$0xff]
    %v1941 = vld [vmem:[%s2 + $0x18] sm:$0xff]
    %v1942 = vld [vmem:[%s3] sm:$0xff]
    %v1943 = vld [vmem:[%s3 + $0x8] sm:$0xff]
    %v1944 = vld [vmem:[%s3 + $0x10] sm:$0xff]
    %v1945 = vld [vmem:[%s3 + $0x18] sm:$0xff]
    %1947 = vset.pattern.permute.xlu0 0
    %1948 = vperm.xlu0 %1947, %v1942
    %v1949 = vpop.permute.xlu0 %1948
    %1952 = vset.pattern.permute.xlu0 0
    %1953 = vperm.xlu0 %1952, %v1943
    %v1954 = vpop.permute.xlu0 %1953
    %1957 = vset.pattern.permute.xlu0 0
    %1958 = vperm.xlu0 %1957, %v1944
    %v1959 = vpop.permute.xlu0 %1958
    %1962 = vset.pattern.permute.xlu0 0
    %1963 = vperm.xlu0 %1962, %v1945
    %v1964 = vpop.permute.xlu0 %1963
    %vm1966 = vcmask 228352
    %v1968 = vsel %vm1966, %v1938, 0
    %v1971 = vsel %vm1966, %v1939, 0
    %v1974 = vsel %vm1966, %v1940, 0
    %v1977 = vsel %vm1966, %v1941, 0
    %vm1979 = vcmask 1043456
    %v1981 = vsel %vm1979, %v1909, 0
    %v1984 = vsel %vm1979, %v1937, 0
    %1986 = vmatprep.subr.mxu0 0.0
    %1987 = vmatpush1.msra.mxu0 0.0
    %1988 = vmatprep.subr.mxu0 0.0
    %1989 = vmatpush1.msra.mxu0 0.0
    %1990 = vmatprep.subr.mxu0 0.0
    %1991 = vmatpush1.msra.mxu0 0.0
    %1992 = vmatprep.subr.mxu0 0.0
    %1993 = vmatpush1.msra.mxu0 0.0
    %1994 = vmatprep.subr.mxu0 0.0
    %1995 = vmatpush1.msra.mxu0 0.0
    %1996 = vmatprep.subr.mxu0 0.0
    %1997 = vmatpush1.msra.mxu0 0.0
    %1998 = vmatprep.subr.mxu0 0.0
    %1999 = vmatpush1.msra.mxu0 0.0
    %2000 = vmatprep.subr.mxu0 0.0
    %2001 = vmatpush1.msra.mxu0 0.0
    %2002 = vmatprep.subr.mxu0 0.0
    %2003 = vmatpush1.msra.mxu0 0.0
    %2004 = vmatprep.subr.mxu0 0.0
    %2005 = vmatpush1.msra.mxu0 0.0
    %2006 = vmatprep.subr.mxu0 0.0
    %2007 = vmatpush1.msra.mxu0 0.0
    %2008 = vmatprep.subr.mxu0 0.0
    %2009 = vmatpush1.msra.mxu0 0.0
    %2010 = vmatprep.subr.mxu0 %v1984
    %2011 = vmatpush1.msra.mxu0 %v1981
    %2012 = vmatprep.subr.mxu0 %v1936
    %2013 = vmatpush1.msra.mxu0 %v1908
    %2014 = vmatprep.subr.mxu0 %v1935
    %2015 = vmatpush1.msra.mxu0 %v1907
    %2016 = vmatprep.subr.mxu0 %v1934
    %2017 = vmatpush1.msra.mxu0 %v1906
    %2018 = vmatprep.subr.mxu0 0.0
    %2019 = vmatpush2.msra.mxu0 0.0
    %2020 = vmatprep.subr.mxu0 0.0
    %2021 = vmatpush2.msra.mxu0 0.0
    %2022 = vmatprep.subr.mxu0 0.0
    %2023 = vmatpush2.msra.mxu0 0.0
    %2024 = vmatprep.subr.mxu0 0.0
    %2025 = vmatpush2.msra.mxu0 0.0
    %2026 = vmatprep.subr.mxu0 0.0
    %2027 = vmatpush2.msra.mxu0 0.0
    %2028 = vmatprep.subr.mxu0 0.0
    %2029 = vmatpush2.msra.mxu0 0.0
    %2030 = vmatprep.subr.mxu0 0.0
    %2031 = vmatpush2.msra.mxu0 0.0
    %2032 = vmatprep.subr.mxu0 0.0
    %2033 = vmatpush2.msra.mxu0 0.0
    %2034 = vmatprep.subr.mxu0 0.0
    %2035 = vmatpush2.msra.mxu0 0.0
    %2036 = vmatprep.subr.mxu0 0.0
    %2037 = vmatpush2.msra.mxu0 0.0
    %2038 = vmatprep.subr.mxu0 0.0
    %2039 = vmatpush2.msra.mxu0 0.0
    %2040 = vmatprep.subr.mxu0 0.0
    %2041 = vmatpush2.msra.mxu0 0.0
    %2042 = vmatprep.subr.mxu0 0.0
    %2043 = vmatpush2.msra.mxu0 0.0
    %2044 = vmatprep.subr.mxu0 0.0
    %2045 = vmatpush2.msra.mxu0 0.0
    %2046 = vmatprep.subr.mxu0 0.0
    %2047 = vmatpush2.msra.mxu0 0.0
    %2048 = vmatprep.subr.mxu0 0.0
    %2049 = vmatpush2.msra.mxu0 0.0
    %2050 = vmatprep.mubr.f32.mxu0 0.0
    %2051 = vmatmul.mubr.f32.gmra.mxu0 %v1968
    %v2052 = vpop.f32.mrf.mxu0
    %v2053 = vadd.f32 %v1949, %v2052
    %v2054 = vpop.f32.mrf.mxu0
    %v2055 = vadd.f32 %v1949, %v2054
    %2056 = vmatprep.mubr.f32.mxu0 0.0
    %2057 = vmatmul.mubr.f32.gmra.mxu0 %v1971
    %v2058 = vpop.f32.mrf.mxu0
    %v2059 = vadd.f32 %v1954, %v2058
    %v2060 = vpop.f32.mrf.mxu0
    %v2061 = vadd.f32 %v1954, %v2060
    %2062 = vmatprep.mubr.f32.mxu0 0.0
    %2063 = vmatmul.mubr.f32.gmra.mxu0 %v1974
    %v2064 = vpop.f32.mrf.mxu0
    %v2065 = vadd.f32 %v1959, %v2064
    %v2066 = vpop.f32.mrf.mxu0
    %v2067 = vadd.f32 %v1959, %v2066
    %2068 = vmatprep.mubr.f32.mxu0 0.0
    %2069 = vmatmul.mubr.f32.gmra.mxu0 %v1977
    %v2070 = vpop.f32.mrf.mxu0
    %v2071 = vadd.f32 %v1964, %v2070
    %v2072 = vpop.f32.mrf.mxu0
    %v2073 = vadd.f32 %v1964, %v2072
    %2074 = vdwg.mxu0
    %2079 = vrot.lane.b32.xlu0 %v2053, 112
    %v2080 = vpop.permute.xlu0 %2079
    %2081 = vrot.lane.b32.xlu0 %v2059, 112
    %v2082 = vpop.permute.xlu0 %2081
    %2083 = vrot.lane.b32.xlu0 %v2065, 112
    %v2084 = vpop.permute.xlu0 %2083
    %2085 = vrot.lane.b32.xlu0 %v2071, 112
    %v2086 = vpop.permute.xlu0 %2085
    %2091 = vrot.lane.b32.xlu0 %v2053, 96
    %v2092 = vpop.permute.xlu0 %2091
    %2093 = vrot.lane.b32.xlu0 %v2059, 96
    %v2094 = vpop.permute.xlu0 %2093
    %2095 = vrot.lane.b32.xlu0 %v2065, 96
    %v2096 = vpop.permute.xlu0 %2095
    %2097 = vrot.lane.b32.xlu0 %v2071, 96
    %v2098 = vpop.permute.xlu0 %2097
    %2103 = vrot.lane.b32.xlu0 %v2053, 80
    %v2104 = vpop.permute.xlu0 %2103
    %2105 = vrot.lane.b32.xlu0 %v2059, 80
    %v2106 = vpop.permute.xlu0 %2105
    %2107 = vrot.lane.b32.xlu0 %v2065, 80
    %v2108 = vpop.permute.xlu0 %2107
    %2109 = vrot.lane.b32.xlu0 %v2071, 80
    %v2110 = vpop.permute.xlu0 %2109
    %2115 = vrot.lane.b32.xlu0 %v2053, 64
    %v2116 = vpop.permute.xlu0 %2115
    %2117 = vrot.lane.b32.xlu0 %v2059, 64
    %v2118 = vpop.permute.xlu0 %2117
    %2119 = vrot.lane.b32.xlu0 %v2065, 64
    %v2120 = vpop.permute.xlu0 %2119
    %2121 = vrot.lane.b32.xlu0 %v2071, 64
    %v2122 = vpop.permute.xlu0 %2121
    %2127 = vrot.lane.b32.xlu0 %v2053, 48
    %v2128 = vpop.permute.xlu0 %2127
    %2129 = vrot.lane.b32.xlu0 %v2059, 48
    %v2130 = vpop.permute.xlu0 %2129
    %2131 = vrot.lane.b32.xlu0 %v2065, 48
    %v2132 = vpop.permute.xlu0 %2131
    %2133 = vrot.lane.b32.xlu0 %v2071, 48
    %v2134 = vpop.permute.xlu0 %2133
    %2139 = vrot.lane.b32.xlu0 %v2053, 32
    %v2140 = vpop.permute.xlu0 %2139
    %2141 = vrot.lane.b32.xlu0 %v2059, 32
    %v2142 = vpop.permute.xlu0 %2141
    %2143 = vrot.lane.b32.xlu0 %v2065, 32
    %v2144 = vpop.permute.xlu0 %2143
    %2145 = vrot.lane.b32.xlu0 %v2071, 32
    %v2146 = vpop.permute.xlu0 %2145
    %2151 = vrot.lane.b32.xlu0 %v2053, 16
    %v2152 = vpop.permute.xlu0 %2151
    %2153 = vrot.lane.b32.xlu0 %v2059, 16
    %v2154 = vpop.permute.xlu0 %2153
    %2155 = vrot.lane.b32.xlu0 %v2065, 16
    %v2156 = vpop.permute.xlu0 %2155
    %2157 = vrot.lane.b32.xlu0 %v2071, 16
    %v2158 = vpop.permute.xlu0 %2157
    %2167 = vrot.lane.b32.xlu0 %v2055, 112
    %v2168 = vpop.permute.xlu0 %2167
    %2169 = vrot.lane.b32.xlu0 %v2061, 112
    %v2170 = vpop.permute.xlu0 %2169
    %2171 = vrot.lane.b32.xlu0 %v2067, 112
    %v2172 = vpop.permute.xlu0 %2171
    %2173 = vrot.lane.b32.xlu0 %v2073, 112
    %v2174 = vpop.permute.xlu0 %2173
    %2179 = vrot.lane.b32.xlu0 %v2055, 96
    %v2180 = vpop.permute.xlu0 %2179
    %2181 = vrot.lane.b32.xlu0 %v2061, 96
    %v2182 = vpop.permute.xlu0 %2181
    %2183 = vrot.lane.b32.xlu0 %v2067, 96
    %v2184 = vpop.permute.xlu0 %2183
    %2185 = vrot.lane.b32.xlu0 %v2073, 96
    %v2186 = vpop.permute.xlu0 %2185
    %2191 = vrot.lane.b32.xlu0 %v2055, 80
    %v2192 = vpop.permute.xlu0 %2191
    %2193 = vrot.lane.b32.xlu0 %v2061, 80
    %v2194 = vpop.permute.xlu0 %2193
    %2195 = vrot.lane.b32.xlu0 %v2067, 80
    %v2196 = vpop.permute.xlu0 %2195
    %2197 = vrot.lane.b32.xlu0 %v2073, 80
    %v2198 = vpop.permute.xlu0 %2197
    %2203 = vrot.lane.b32.xlu0 %v2055, 64
    %v2204 = vpop.permute.xlu0 %2203
    %2205 = vrot.lane.b32.xlu0 %v2061, 64
    %v2206 = vpop.permute.xlu0 %2205
    %2207 = vrot.lane.b32.xlu0 %v2067, 64
    %v2208 = vpop.permute.xlu0 %2207
    %2209 = vrot.lane.b32.xlu0 %v2073, 64
    %v2210 = vpop.permute.xlu0 %2209
    %2215 = vrot.lane.b32.xlu0 %v2055, 48
    %v2216 = vpop.permute.xlu0 %2215
    %2217 = vrot.lane.b32.xlu0 %v2061, 48
    %v2218 = vpop.permute.xlu0 %2217
    %2219 = vrot.lane.b32.xlu0 %v2067, 48
    %v2220 = vpop.permute.xlu0 %2219
    %2221 = vrot.lane.b32.xlu0 %v2073, 48
    %v2222 = vpop.permute.xlu0 %2221
    %2227 = vrot.lane.b32.xlu0 %v2055, 32
    %v2228 = vpop.permute.xlu0 %2227
    %2229 = vrot.lane.b32.xlu0 %v2061, 32
    %v2230 = vpop.permute.xlu0 %2229
    %2231 = vrot.lane.b32.xlu0 %v2067, 32
    %v2232 = vpop.permute.xlu0 %2231
    %2233 = vrot.lane.b32.xlu0 %v2073, 32
    %v2234 = vpop.permute.xlu0 %2233
    %2239 = vrot.lane.b32.xlu0 %v2055, 16
    %v2240 = vpop.permute.xlu0 %2239
    %2241 = vrot.lane.b32.xlu0 %v2061, 16
    %v2242 = vpop.permute.xlu0 %2241
    %2243 = vrot.lane.b32.xlu0 %v2067, 16
    %v2244 = vpop.permute.xlu0 %2243
    %2245 = vrot.lane.b32.xlu0 %v2073, 16
    %v2246 = vpop.permute.xlu0 %2245
    %v2251 = vcombine.low %v2053, %v2092
    %v2252 = vcombine.high %v2053, %v2092
    %v2254 = vunpack.c.l.s4 1983009808
    %v2255 = vunpack.c.0.s8 %v2254
    %v2256 = vlaneseq
    %v2257 = vshrl.u32 %v2256, 7
    %v2258 = vsub.s32 %v2255, %v2257
    %v2259 = vrot.slane %v2251, %v2258
    %v2261 = vunpack.c.l.s4 1983009808
    %v2262 = vunpack.c.0.s8 %v2261
    %v2263 = vlaneseq
    %v2264 = vshrl.u32 %v2263, 7
    %v2265 = vsub.s32 %v2262, %v2264
    %v2266 = vrot.slane %v2252, %v2265
    %v2267 = vcombine.low %v2080, %v2104
    %v2268 = vcombine.high %v2080, %v2104
    %v2270 = vunpack.c.l.s4 1983009808
    %v2271 = vunpack.c.0.s8 %v2270
    %v2272 = vlaneseq
    %v2273 = vshrl.u32 %v2272, 7
    %v2274 = vsub.s32 %v2271, %v2273
    %v2275 = vrot.slane %v2267, %v2274
    %v2277 = vunpack.c.l.s4 1983009808
    %v2278 = vunpack.c.0.s8 %v2277
    %v2279 = vlaneseq
    %v2280 = vshrl.u32 %v2279, 7
    %v2281 = vsub.s32 %v2278, %v2280
    %v2282 = vrot.slane %v2268, %v2281
    %v2283 = vcombine.low %v2116, %v2140
    %v2284 = vcombine.high %v2116, %v2140
    %v2286 = vunpack.c.l.s4 1983009808
    %v2287 = vunpack.c.0.s8 %v2286
    %v2288 = vlaneseq
    %v2289 = vshrl.u32 %v2288, 7
    %v2290 = vsub.s32 %v2287, %v2289
    %v2291 = vrot.slane %v2283, %v2290
    %v2293 = vunpack.c.l.s4 1983009808
    %v2294 = vunpack.c.0.s8 %v2293
    %v2295 = vlaneseq
    %v2296 = vshrl.u32 %v2295, 7
    %v2297 = vsub.s32 %v2294, %v2296
    %v2298 = vrot.slane %v2284, %v2297
    %v2299 = vcombine.low %v2128, %v2152
    %v2300 = vcombine.high %v2128, %v2152
    %v2302 = vunpack.c.l.s4 1983009808
    %v2303 = vunpack.c.0.s8 %v2302
    %v2304 = vlaneseq
    %v2305 = vshrl.u32 %v2304, 7
    %v2306 = vsub.s32 %v2303, %v2305
    %v2307 = vrot.slane %v2299, %v2306
    %v2309 = vunpack.c.l.s4 1983009808
    %v2310 = vunpack.c.0.s8 %v2309
    %v2311 = vlaneseq
    %v2312 = vshrl.u32 %v2311, 7
    %v2313 = vsub.s32 %v2310, %v2312
    %v2314 = vrot.slane %v2300, %v2313
    %v2315 = vcombine.low %v2259, %v2275
    %v2316 = vcombine.high %v2259, %v2275
    %v2318 = vunpack.c.l.s4 1934713408
    %v2319 = vunpack.c.0.s8 %v2318
    %v2320 = vlaneseq
    %v2321 = vshrl.u32 %v2320, 7
    %v2322 = vsub.s32 %v2319, %v2321
    %v2323 = vrot.slane %v2315, %v2322
    %v2325 = vunpack.c.l.s4 1934713408
    %v2326 = vunpack.c.0.s8 %v2325
    %v2327 = vlaneseq
    %v2328 = vshrl.u32 %v2327, 7
    %v2329 = vsub.s32 %v2326, %v2328
    %v2330 = vrot.slane %v2316, %v2329
    %v2331 = vcombine.low %v2266, %v2282
    %v2332 = vcombine.high %v2266, %v2282
    %v2334 = vunpack.c.l.s4 1934713408
    %v2335 = vunpack.c.0.s8 %v2334
    %v2336 = vlaneseq
    %v2337 = vshrl.u32 %v2336, 7
    %v2338 = vsub.s32 %v2335, %v2337
    %v2339 = vrot.slane %v2331, %v2338
    %v2341 = vunpack.c.l.s4 1934713408
    %v2342 = vunpack.c.0.s8 %v2341
    %v2343 = vlaneseq
    %v2344 = vshrl.u32 %v2343, 7
    %v2345 = vsub.s32 %v2342, %v2344
    %v2346 = vrot.slane %v2332, %v2345
    %v2347 = vcombine.low %v2291, %v2307
    %v2348 = vcombine.high %v2291, %v2307
    %v2350 = vunpack.c.l.s4 1934713408
    %v2351 = vunpack.c.0.s8 %v2350
    %v2352 = vlaneseq
    %v2353 = vshrl.u32 %v2352, 7
    %v2354 = vsub.s32 %v2351, %v2353
    %v2355 = vrot.slane %v2347, %v2354
    %v2357 = vunpack.c.l.s4 1934713408
    %v2358 = vunpack.c.0.s8 %v2357
    %v2359 = vlaneseq
    %v2360 = vshrl.u32 %v2359, 7
    %v2361 = vsub.s32 %v2358, %v2360
    %v2362 = vrot.slane %v2348, %v2361
    %v2363 = vcombine.low %v2298, %v2314
    %v2364 = vcombine.high %v2298, %v2314
    %v2366 = vunpack.c.l.s4 1934713408
    %v2367 = vunpack.c.0.s8 %v2366
    %v2368 = vlaneseq
    %v2369 = vshrl.u32 %v2368, 7
    %v2370 = vsub.s32 %v2367, %v2369
    %v2371 = vrot.slane %v2363, %v2370
    %v2373 = vunpack.c.l.s4 1934713408
    %v2374 = vunpack.c.0.s8 %v2373
    %v2375 = vlaneseq
    %v2376 = vshrl.u32 %v2375, 7
    %v2377 = vsub.s32 %v2374, %v2376
    %v2378 = vrot.slane %v2364, %v2377
    %v2379 = vcombine.low %v2323, %v2355
    %v2380 = vcombine.high %v2323, %v2355
    %v2381 = vcombine.low %v2330, %v2362
    %v2382 = vcombine.high %v2330, %v2362
    %v2383 = vcombine.low %v2339, %v2371
    %v2384 = vcombine.high %v2339, %v2371
    %v2385 = vcombine.low %v2346, %v2378
    %v2386 = vcombine.high %v2346, %v2378
    %v2387 = vcombine.low %v2055, %v2180
    %v2388 = vcombine.high %v2055, %v2180
    %v2390 = vunpack.c.l.s4 1983009808
    %v2391 = vunpack.c.0.s8 %v2390
    %v2392 = vlaneseq
    %v2393 = vshrl.u32 %v2392, 7
    %v2394 = vsub.s32 %v2391, %v2393
    %v2395 = vrot.slane %v2387, %v2394
    %v2397 = vunpack.c.l.s4 1983009808
    %v2398 = vunpack.c.0.s8 %v2397
    %v2399 = vlaneseq
    %v2400 = vshrl.u32 %v2399, 7
    %v2401 = vsub.s32 %v2398, %v2400
    %v2402 = vrot.slane %v2388, %v2401
    %v2403 = vcombine.low %v2168, %v2192
    %v2404 = vcombine.high %v2168, %v2192
    %v2406 = vunpack.c.l.s4 1983009808
    %v2407 = vunpack.c.0.s8 %v2406
    %v2408 = vlaneseq
    %v2409 = vshrl.u32 %v2408, 7
    %v2410 = vsub.s32 %v2407, %v2409
    %v2411 = vrot.slane %v2403, %v2410
    %v2413 = vunpack.c.l.s4 1983009808
    %v2414 = vunpack.c.0.s8 %v2413
    %v2415 = vlaneseq
    %v2416 = vshrl.u32 %v2415, 7
    %v2417 = vsub.s32 %v2414, %v2416
    %v2418 = vrot.slane %v2404, %v2417
    %v2419 = vcombine.low %v2204, %v2228
    %v2420 = vcombine.high %v2204, %v2228
    %v2422 = vunpack.c.l.s4 1983009808
    %v2423 = vunpack.c.0.s8 %v2422
    %v2424 = vlaneseq
    %v2425 = vshrl.u32 %v2424, 7
    %v2426 = vsub.s32 %v2423, %v2425
    %v2427 = vrot.slane %v2419, %v2426
    %v2429 = vunpack.c.l.s4 1983009808
    %v2430 = vunpack.c.0.s8 %v2429
    %v2431 = vlaneseq
    %v2432 = vshrl.u32 %v2431, 7
    %v2433 = vsub.s32 %v2430, %v2432
    %v2434 = vrot.slane %v2420, %v2433
    %v2435 = vcombine.low %v2216, %v2240
    %v2436 = vcombine.high %v2216, %v2240
    %v2438 = vunpack.c.l.s4 1983009808
    %v2439 = vunpack.c.0.s8 %v2438
    %v2440 = vlaneseq
    %v2441 = vshrl.u32 %v2440, 7
    %v2442 = vsub.s32 %v2439, %v2441
    %v2443 = vrot.slane %v2435, %v2442
    %v2445 = vunpack.c.l.s4 1983009808
    %v2446 = vunpack.c.0.s8 %v2445
    %v2447 = vlaneseq
    %v2448 = vshrl.u32 %v2447, 7
    %v2449 = vsub.s32 %v2446, %v2448
    %v2450 = vrot.slane %v2436, %v2449
    %v2451 = vcombine.low %v2395, %v2411
    %v2452 = vcombine.high %v2395, %v2411
    %v2454 = vunpack.c.l.s4 1934713408
    %v2455 = vunpack.c.0.s8 %v2454
    %v2456 = vlaneseq
    %v2457 = vshrl.u32 %v2456, 7
    %v2458 = vsub.s32 %v2455, %v2457
    %v2459 = vrot.slane %v2451, %v2458
    %v2461 = vunpack.c.l.s4 1934713408
    %v2462 = vunpack.c.0.s8 %v2461
    %v2463 = vlaneseq
    %v2464 = vshrl.u32 %v2463, 7
    %v2465 = vsub.s32 %v2462, %v2464
    %v2466 = vrot.slane %v2452, %v2465
    %v2467 = vcombine.low %v2402, %v2418
    %v2468 = vcombine.high %v2402, %v2418
    %v2470 = vunpack.c.l.s4 1934713408
    %v2471 = vunpack.c.0.s8 %v2470
    %v2472 = vlaneseq
    %v2473 = vshrl.u32 %v2472, 7
    %v2474 = vsub.s32 %v2471, %v2473
    %v2475 = vrot.slane %v2467, %v2474
    %v2477 = vunpack.c.l.s4 1934713408
    %v2478 = vunpack.c.0.s8 %v2477
    %v2479 = vlaneseq
    %v2480 = vshrl.u32 %v2479, 7
    %v2481 = vsub.s32 %v2478, %v2480
    %v2482 = vrot.slane %v2468, %v2481
    %v2483 = vcombine.low %v2427, %v2443
    %v2484 = vcombine.high %v2427, %v2443
    %v2486 = vunpack.c.l.s4 1934713408
    %v2487 = vunpack.c.0.s8 %v2486
    %v2488 = vlaneseq
    %v2489 = vshrl.u32 %v2488, 7
    %v2490 = vsub.s32 %v2487, %v2489
    %v2491 = vrot.slane %v2483, %v2490
    %v2493 = vunpack.c.l.s4 1934713408
    %v2494 = vunpack.c.0.s8 %v2493
    %v2495 = vlaneseq
    %v2496 = vshrl.u32 %v2495, 7
    %v2497 = vsub.s32 %v2494, %v2496
    %v2498 = vrot.slane %v2484, %v2497
    %v2499 = vcombine.low %v2434, %v2450
    %v2500 = vcombine.high %v2434, %v2450
    %v2502 = vunpack.c.l.s4 1934713408
    %v2503 = vunpack.c.0.s8 %v2502
    %v2504 = vlaneseq
    %v2505 = vshrl.u32 %v2504, 7
    %v2506 = vsub.s32 %v2503, %v2505
    %v2507 = vrot.slane %v2499, %v2506
    %v2509 = vunpack.c.l.s4 1934713408
    %v2510 = vunpack.c.0.s8 %v2509
    %v2511 = vlaneseq
    %v2512 = vshrl.u32 %v2511, 7
    %v2513 = vsub.s32 %v2510, %v2512
    %v2514 = vrot.slane %v2500, %v2513
    %v2515 = vcombine.low %v2459, %v2491
    %v2516 = vcombine.high %v2459, %v2491
    %v2517 = vcombine.low %v2466, %v2498
    %v2518 = vcombine.high %v2466, %v2498
    %v2519 = vcombine.low %v2475, %v2507
    %v2520 = vcombine.high %v2475, %v2507
    %v2521 = vcombine.low %v2482, %v2514
    %v2522 = vcombine.high %v2482, %v2514
    %v2523 = vcombine.low %v2059, %v2094
    %v2524 = vcombine.high %v2059, %v2094
    %v2526 = vunpack.c.l.s4 1983009808
    %v2527 = vunpack.c.0.s8 %v2526
    %v2528 = vlaneseq
    %v2529 = vshrl.u32 %v2528, 7
    %v2530 = vsub.s32 %v2527, %v2529
    %v2531 = vrot.slane %v2523, %v2530
    %v2533 = vunpack.c.l.s4 1983009808
    %v2534 = vunpack.c.0.s8 %v2533
    %v2535 = vlaneseq
    %v2536 = vshrl.u32 %v2535, 7
    %v2537 = vsub.s32 %v2534, %v2536
    %v2538 = vrot.slane %v2524, %v2537
    %v2539 = vcombine.low %v2082, %v2106
    %v2540 = vcombine.high %v2082, %v2106
    %v2542 = vunpack.c.l.s4 1983009808
    %v2543 = vunpack.c.0.s8 %v2542
    %v2544 = vlaneseq
    %v2545 = vshrl.u32 %v2544, 7
    %v2546 = vsub.s32 %v2543, %v2545
    %v2547 = vrot.slane %v2539, %v2546
    %v2549 = vunpack.c.l.s4 1983009808
    %v2550 = vunpack.c.0.s8 %v2549
    %v2551 = vlaneseq
    %v2552 = vshrl.u32 %v2551, 7
    %v2553 = vsub.s32 %v2550, %v2552
    %v2554 = vrot.slane %v2540, %v2553
    %v2555 = vcombine.low %v2118, %v2142
    %v2556 = vcombine.high %v2118, %v2142
    %v2558 = vunpack.c.l.s4 1983009808
    %v2559 = vunpack.c.0.s8 %v2558
    %v2560 = vlaneseq
    %v2561 = vshrl.u32 %v2560, 7
    %v2562 = vsub.s32 %v2559, %v2561
    %v2563 = vrot.slane %v2555, %v2562
    %v2565 = vunpack.c.l.s4 1983009808
    %v2566 = vunpack.c.0.s8 %v2565
    %v2567 = vlaneseq
    %v2568 = vshrl.u32 %v2567, 7
    %v2569 = vsub.s32 %v2566, %v2568
    %v2570 = vrot.slane %v2556, %v2569
    %v2571 = vcombine.low %v2130, %v2154
    %v2572 = vcombine.high %v2130, %v2154
    %v2574 = vunpack.c.l.s4 1983009808
    %v2575 = vunpack.c.0.s8 %v2574
    %v2576 = vlaneseq
    %v2577 = vshrl.u32 %v2576, 7
    %v2578 = vsub.s32 %v2575, %v2577
    %v2579 = vrot.slane %v2571, %v2578
    %v2581 = vunpack.c.l.s4 1983009808
    %v2582 = vunpack.c.0.s8 %v2581
    %v2583 = vlaneseq
    %v2584 = vshrl.u32 %v2583, 7
    %v2585 = vsub.s32 %v2582, %v2584
    %v2586 = vrot.slane %v2572, %v2585
    %v2587 = vcombine.low %v2531, %v2547
    %v2588 = vcombine.high %v2531, %v2547
    %v2590 = vunpack.c.l.s4 1934713408
    %v2591 = vunpack.c.0.s8 %v2590
    %v2592 = vlaneseq
    %v2593 = vshrl.u32 %v2592, 7
    %v2594 = vsub.s32 %v2591, %v2593
    %v2595 = vrot.slane %v2587, %v2594
    %v2597 = vunpack.c.l.s4 1934713408
    %v2598 = vunpack.c.0.s8 %v2597
    %v2599 = vlaneseq
    %v2600 = vshrl.u32 %v2599, 7
    %v2601 = vsub.s32 %v2598, %v2600
    %v2602 = vrot.slane %v2588, %v2601
    %v2603 = vcombine.low %v2538, %v2554
    %v2604 = vcombine.high %v2538, %v2554
    %v2606 = vunpack.c.l.s4 1934713408
    %v2607 = vunpack.c.0.s8 %v2606
    %v2608 = vlaneseq
    %v2609 = vshrl.u32 %v2608, 7
    %v2610 = vsub.s32 %v2607, %v2609
    %v2611 = vrot.slane %v2603, %v2610
    %v2613 = vunpack.c.l.s4 1934713408
    %v2614 = vunpack.c.0.s8 %v2613
    %v2615 = vlaneseq
    %v2616 = vshrl.u32 %v2615, 7
    %v2617 = vsub.s32 %v2614, %v2616
    %v2618 = vrot.slane %v2604, %v2617
    %v2619 = vcombine.low %v2563, %v2579
    %v2620 = vcombine.high %v2563, %v2579
    %v2622 = vunpack.c.l.s4 1934713408
    %v2623 = vunpack.c.0.s8 %v2622
    %v2624 = vlaneseq
    %v2625 = vshrl.u32 %v2624, 7
    %v2626 = vsub.s32 %v2623, %v2625
    %v2627 = vrot.slane %v2619, %v2626
    %v2629 = vunpack.c.l.s4 1934713408
    %v2630 = vunpack.c.0.s8 %v2629
    %v2631 = vlaneseq
    %v2632 = vshrl.u32 %v2631, 7
    %v2633 = vsub.s32 %v2630, %v2632
    %v2634 = vrot.slane %v2620, %v2633
    %v2635 = vcombine.low %v2570, %v2586
    %v2636 = vcombine.high %v2570, %v2586
    %v2638 = vunpack.c.l.s4 1934713408
    %v2639 = vunpack.c.0.s8 %v2638
    %v2640 = vlaneseq
    %v2641 = vshrl.u32 %v2640, 7
    %v2642 = vsub.s32 %v2639, %v2641
    %v2643 = vrot.slane %v2635, %v2642
    %v2645 = vunpack.c.l.s4 1934713408
    %v2646 = vunpack.c.0.s8 %v2645
    %v2647 = vlaneseq
    %v2648 = vshrl.u32 %v2647, 7
    %v2649 = vsub.s32 %v2646, %v2648
    %v2650 = vrot.slane %v2636, %v2649
    %v2651 = vcombine.low %v2595, %v2627
    %v2652 = vcombine.high %v2595, %v2627
    %v2653 = vcombine.low %v2602, %v2634
    %v2654 = vcombine.high %v2602, %v2634
    %v2655 = vcombine.low %v2611, %v2643
    %v2656 = vcombine.high %v2611, %v2643
    %v2657 = vcombine.low %v2618, %v2650
    %v2658 = vcombine.high %v2618, %v2650
    %v2659 = vcombine.low %v2061, %v2182
    %v2660 = vcombine.high %v2061, %v2182
    %v2662 = vunpack.c.l.s4 1983009808
    %v2663 = vunpack.c.0.s8 %v2662
    %v2664 = vlaneseq
    %v2665 = vshrl.u32 %v2664, 7
    %v2666 = vsub.s32 %v2663, %v2665
    %v2667 = vrot.slane %v2659, %v2666
    %v2669 = vunpack.c.l.s4 1983009808
    %v2670 = vunpack.c.0.s8 %v2669
    %v2671 = vlaneseq
    %v2672 = vshrl.u32 %v2671, 7
    %v2673 = vsub.s32 %v2670, %v2672
    %v2674 = vrot.slane %v2660, %v2673
    %v2675 = vcombine.low %v2170, %v2194
    %v2676 = vcombine.high %v2170, %v2194
    %v2678 = vunpack.c.l.s4 1983009808
    %v2679 = vunpack.c.0.s8 %v2678
    %v2680 = vlaneseq
    %v2681 = vshrl.u32 %v2680, 7
    %v2682 = vsub.s32 %v2679, %v2681
    %v2683 = vrot.slane %v2675, %v2682
    %v2685 = vunpack.c.l.s4 1983009808
    %v2686 = vunpack.c.0.s8 %v2685
    %v2687 = vlaneseq
    %v2688 = vshrl.u32 %v2687, 7
    %v2689 = vsub.s32 %v2686, %v2688
    %v2690 = vrot.slane %v2676, %v2689
    %v2691 = vcombine.low %v2206, %v2230
    %v2692 = vcombine.high %v2206, %v2230
    %v2694 = vunpack.c.l.s4 1983009808
    %v2695 = vunpack.c.0.s8 %v2694
    %v2696 = vlaneseq
    %v2697 = vshrl.u32 %v2696, 7
    %v2698 = vsub.s32 %v2695, %v2697
    %v2699 = vrot.slane %v2691, %v2698
    %v2701 = vunpack.c.l.s4 1983009808
    %v2702 = vunpack.c.0.s8 %v2701
    %v2703 = vlaneseq
    %v2704 = vshrl.u32 %v2703, 7
    %v2705 = vsub.s32 %v2702, %v2704
    %v2706 = vrot.slane %v2692, %v2705
    %v2707 = vcombine.low %v2218, %v2242
    %v2708 = vcombine.high %v2218, %v2242
    %v2710 = vunpack.c.l.s4 1983009808
    %v2711 = vunpack.c.0.s8 %v2710
    %v2712 = vlaneseq
    %v2713 = vshrl.u32 %v2712, 7
    %v2714 = vsub.s32 %v2711, %v2713
    %v2715 = vrot.slane %v2707, %v2714
    %v2717 = vunpack.c.l.s4 1983009808
    %v2718 = vunpack.c.0.s8 %v2717
    %v2719 = vlaneseq
    %v2720 = vshrl.u32 %v2719, 7
    %v2721 = vsub.s32 %v2718, %v2720
    %v2722 = vrot.slane %v2708, %v2721
    %v2723 = vcombine.low %v2667, %v2683
    %v2724 = vcombine.high %v2667, %v2683
    %v2726 = vunpack.c.l.s4 1934713408
    %v2727 = vunpack.c.0.s8 %v2726
    %v2728 = vlaneseq
    %v2729 = vshrl.u32 %v2728, 7
    %v2730 = vsub.s32 %v2727, %v2729
    %v2731 = vrot.slane %v2723, %v2730
    %v2733 = vunpack.c.l.s4 1934713408
    %v2734 = vunpack.c.0.s8 %v2733
    %v2735 = vlaneseq
    %v2736 = vshrl.u32 %v2735, 7
    %v2737 = vsub.s32 %v2734, %v2736
    %v2738 = vrot.slane %v2724, %v2737
    %v2739 = vcombine.low %v2674, %v2690
    %v2740 = vcombine.high %v2674, %v2690
    %v2742 = vunpack.c.l.s4 1934713408
    %v2743 = vunpack.c.0.s8 %v2742
    %v2744 = vlaneseq
    %v2745 = vshrl.u32 %v2744, 7
    %v2746 = vsub.s32 %v2743, %v2745
    %v2747 = vrot.slane %v2739, %v2746
    %v2749 = vunpack.c.l.s4 1934713408
    %v2750 = vunpack.c.0.s8 %v2749
    %v2751 = vlaneseq
    %v2752 = vshrl.u32 %v2751, 7
    %v2753 = vsub.s32 %v2750, %v2752
    %v2754 = vrot.slane %v2740, %v2753
    %v2755 = vcombine.low %v2699, %v2715
    %v2756 = vcombine.high %v2699, %v2715
    %v2758 = vunpack.c.l.s4 1934713408
    %v2759 = vunpack.c.0.s8 %v2758
    %v2760 = vlaneseq
    %v2761 = vshrl.u32 %v2760, 7
    %v2762 = vsub.s32 %v2759, %v2761
    %v2763 = vrot.slane %v2755, %v2762
    %v2765 = vunpack.c.l.s4 1934713408
    %v2766 = vunpack.c.0.s8 %v2765
    %v2767 = vlaneseq
    %v2768 = vshrl.u32 %v2767, 7
    %v2769 = vsub.s32 %v2766, %v2768
    %v2770 = vrot.slane %v2756, %v2769
    %v2771 = vcombine.low %v2706, %v2722
    %v2772 = vcombine.high %v2706, %v2722
    %v2774 = vunpack.c.l.s4 1934713408
    %v2775 = vunpack.c.0.s8 %v2774
    %v2776 = vlaneseq
    %v2777 = vshrl.u32 %v2776, 7
    %v2778 = vsub.s32 %v2775, %v2777
    %v2779 = vrot.slane %v2771, %v2778
    %v2781 = vunpack.c.l.s4 1934713408
    %v2782 = vunpack.c.0.s8 %v2781
    %v2783 = vlaneseq
    %v2784 = vshrl.u32 %v2783, 7
    %v2785 = vsub.s32 %v2782, %v2784
    %v2786 = vrot.slane %v2772, %v2785
    %v2787 = vcombine.low %v2731, %v2763
    %v2788 = vcombine.high %v2731, %v2763
    %v2789 = vcombine.low %v2738, %v2770
    %v2790 = vcombine.high %v2738, %v2770
    %v2791 = vcombine.low %v2747, %v2779
    %v2792 = vcombine.high %v2747, %v2779
    %v2793 = vcombine.low %v2754, %v2786
    %v2794 = vcombine.high %v2754, %v2786
    %v2795 = vcombine.low %v2065, %v2096
    %v2796 = vcombine.high %v2065, %v2096
    %v2798 = vunpack.c.l.s4 1983009808
    %v2799 = vunpack.c.0.s8 %v2798
    %v2800 = vlaneseq
    %v2801 = vshrl.u32 %v2800, 7
    %v2802 = vsub.s32 %v2799, %v2801
    %v2803 = vrot.slane %v2795, %v2802
    %v2805 = vunpack.c.l.s4 1983009808
    %v2806 = vunpack.c.0.s8 %v2805
    %v2807 = vlaneseq
    %v2808 = vshrl.u32 %v2807, 7
    %v2809 = vsub.s32 %v2806, %v2808
    %v2810 = vrot.slane %v2796, %v2809
    %v2811 = vcombine.low %v2084, %v2108
    %v2812 = vcombine.high %v2084, %v2108
    %v2814 = vunpack.c.l.s4 1983009808
    %v2815 = vunpack.c.0.s8 %v2814
    %v2816 = vlaneseq
    %v2817 = vshrl.u32 %v2816, 7
    %v2818 = vsub.s32 %v2815, %v2817
    %v2819 = vrot.slane %v2811, %v2818
    %v2821 = vunpack.c.l.s4 1983009808
    %v2822 = vunpack.c.0.s8 %v2821
    %v2823 = vlaneseq
    %v2824 = vshrl.u32 %v2823, 7
    %v2825 = vsub.s32 %v2822, %v2824
    %v2826 = vrot.slane %v2812, %v2825
    %v2827 = vcombine.low %v2120, %v2144
    %v2828 = vcombine.high %v2120, %v2144
    %v2830 = vunpack.c.l.s4 1983009808
    %v2831 = vunpack.c.0.s8 %v2830
    %v2832 = vlaneseq
    %v2833 = vshrl.u32 %v2832, 7
    %v2834 = vsub.s32 %v2831, %v2833
    %v2835 = vrot.slane %v2827, %v2834
    %v2837 = vunpack.c.l.s4 1983009808
    %v2838 = vunpack.c.0.s8 %v2837
    %v2839 = vlaneseq
    %v2840 = vshrl.u32 %v2839, 7
    %v2841 = vsub.s32 %v2838, %v2840
    %v2842 = vrot.slane %v2828, %v2841
    %v2843 = vcombine.low %v2132, %v2156
    %v2844 = vcombine.high %v2132, %v2156
    %v2846 = vunpack.c.l.s4 1983009808
    %v2847 = vunpack.c.0.s8 %v2846
    %v2848 = vlaneseq
    %v2849 = vshrl.u32 %v2848, 7
    %v2850 = vsub.s32 %v2847, %v2849
    %v2851 = vrot.slane %v2843, %v2850
    %v2853 = vunpack.c.l.s4 1983009808
    %v2854 = vunpack.c.0.s8 %v2853
    %v2855 = vlaneseq
    %v2856 = vshrl.u32 %v2855, 7
    %v2857 = vsub.s32 %v2854, %v2856
    %v2858 = vrot.slane %v2844, %v2857
    %v2859 = vcombine.low %v2803, %v2819
    %v2860 = vcombine.high %v2803, %v2819
    %v2862 = vunpack.c.l.s4 1934713408
    %v2863 = vunpack.c.0.s8 %v2862
    %v2864 = vlaneseq
    %v2865 = vshrl.u32 %v2864, 7
    %v2866 = vsub.s32 %v2863, %v2865
    %v2867 = vrot.slane %v2859, %v2866
    %v2869 = vunpack.c.l.s4 1934713408
    %v2870 = vunpack.c.0.s8 %v2869
    %v2871 = vlaneseq
    %v2872 = vshrl.u32 %v2871, 7
    %v2873 = vsub.s32 %v2870, %v2872
    %v2874 = vrot.slane %v2860, %v2873
    %v2875 = vcombine.low %v2810, %v2826
    %v2876 = vcombine.high %v2810, %v2826
    %v2878 = vunpack.c.l.s4 1934713408
    %v2879 = vunpack.c.0.s8 %v2878
    %v2880 = vlaneseq
    %v2881 = vshrl.u32 %v2880, 7
    %v2882 = vsub.s32 %v2879, %v2881
    %v2883 = vrot.slane %v2875, %v2882
    %v2885 = vunpack.c.l.s4 1934713408
    %v2886 = vunpack.c.0.s8 %v2885
    %v2887 = vlaneseq
    %v2888 = vshrl.u32 %v2887, 7
    %v2889 = vsub.s32 %v2886, %v2888
    %v2890 = vrot.slane %v2876, %v2889
    %v2891 = vcombine.low %v2835, %v2851
    %v2892 = vcombine.high %v2835, %v2851
    %v2894 = vunpack.c.l.s4 1934713408
    %v2895 = vunpack.c.0.s8 %v2894
    %v2896 = vlaneseq
    %v2897 = vshrl.u32 %v2896, 7
    %v2898 = vsub.s32 %v2895, %v2897
    %v2899 = vrot.slane %v2891, %v2898
    %v2901 = vunpack.c.l.s4 1934713408
    %v2902 = vunpack.c.0.s8 %v2901
    %v2903 = vlaneseq
    %v2904 = vshrl.u32 %v2903, 7
    %v2905 = vsub.s32 %v2902, %v2904
    %v2906 = vrot.slane %v2892, %v2905
    %v2907 = vcombine.low %v2842, %v2858
    %v2908 = vcombine.high %v2842, %v2858
    %v2910 = vunpack.c.l.s4 1934713408
    %v2911 = vunpack.c.0.s8 %v2910
    %v2912 = vlaneseq
    %v2913 = vshrl.u32 %v2912, 7
    %v2914 = vsub.s32 %v2911, %v2913
    %v2915 = vrot.slane %v2907, %v2914
    %v2917 = vunpack.c.l.s4 1934713408
    %v2918 = vunpack.c.0.s8 %v2917
    %v2919 = vlaneseq
    %v2920 = vshrl.u32 %v2919, 7
    %v2921 = vsub.s32 %v2918, %v2920
    %v2922 = vrot.slane %v2908, %v2921
    %v2923 = vcombine.low %v2867, %v2899
    %v2924 = vcombine.high %v2867, %v2899
    %v2925 = vcombine.low %v2874, %v2906
    %v2926 = vcombine.high %v2874, %v2906
    %v2927 = vcombine.low %v2883, %v2915
    %v2928 = vcombine.high %v2883, %v2915
    %v2929 = vcombine.low %v2890, %v2922
    %v2930 = vcombine.high %v2890, %v2922
    %v2931 = vcombine.low %v2067, %v2184
    %v2932 = vcombine.high %v2067, %v2184
    %v2934 = vunpack.c.l.s4 1983009808
    %v2935 = vunpack.c.0.s8 %v2934
    %v2936 = vlaneseq
    %v2937 = vshrl.u32 %v2936, 7
    %v2938 = vsub.s32 %v2935, %v2937
    %v2939 = vrot.slane %v2931, %v2938
    %v2941 = vunpack.c.l.s4 1983009808
    %v2942 = vunpack.c.0.s8 %v2941
    %v2943 = vlaneseq
    %v2944 = vshrl.u32 %v2943, 7
    %v2945 = vsub.s32 %v2942, %v2944
    %v2946 = vrot.slane %v2932, %v2945
    %v2947 = vcombine.low %v2172, %v2196
    %v2948 = vcombine.high %v2172, %v2196
    %v2950 = vunpack.c.l.s4 1983009808
    %v2951 = vunpack.c.0.s8 %v2950
    %v2952 = vlaneseq
    %v2953 = vshrl.u32 %v2952, 7
    %v2954 = vsub.s32 %v2951, %v2953
    %v2955 = vrot.slane %v2947, %v2954
    %v2957 = vunpack.c.l.s4 1983009808
    %v2958 = vunpack.c.0.s8 %v2957
    %v2959 = vlaneseq
    %v2960 = vshrl.u32 %v2959, 7
    %v2961 = vsub.s32 %v2958, %v2960
    %v2962 = vrot.slane %v2948, %v2961
    %v2963 = vcombine.low %v2208, %v2232
    %v2964 = vcombine.high %v2208, %v2232
    %v2966 = vunpack.c.l.s4 1983009808
    %v2967 = vunpack.c.0.s8 %v2966
    %v2968 = vlaneseq
    %v2969 = vshrl.u32 %v2968, 7
    %v2970 = vsub.s32 %v2967, %v2969
    %v2971 = vrot.slane %v2963, %v2970
    %v2973 = vunpack.c.l.s4 1983009808
    %v2974 = vunpack.c.0.s8 %v2973
    %v2975 = vlaneseq
    %v2976 = vshrl.u32 %v2975, 7
    %v2977 = vsub.s32 %v2974, %v2976
    %v2978 = vrot.slane %v2964, %v2977
    %v2979 = vcombine.low %v2220, %v2244
    %v2980 = vcombine.high %v2220, %v2244
    %v2982 = vunpack.c.l.s4 1983009808
    %v2983 = vunpack.c.0.s8 %v2982
    %v2984 = vlaneseq
    %v2985 = vshrl.u32 %v2984, 7
    %v2986 = vsub.s32 %v2983, %v2985
    %v2987 = vrot.slane %v2979, %v2986
    %v2989 = vunpack.c.l.s4 1983009808
    %v2990 = vunpack.c.0.s8 %v2989
    %v2991 = vlaneseq
    %v2992 = vshrl.u32 %v2991, 7
    %v2993 = vsub.s32 %v2990, %v2992
    %v2994 = vrot.slane %v2980, %v2993
    %v2995 = vcombine.low %v2939, %v2955
    %v2996 = vcombine.high %v2939, %v2955
    %v2998 = vunpack.c.l.s4 1934713408
    %v2999 = vunpack.c.0.s8 %v2998
    %v3000 = vlaneseq
    %v3001 = vshrl.u32 %v3000, 7
    %v3002 = vsub.s32 %v2999, %v3001
    %v3003 = vrot.slane %v2995, %v3002
    %v3005 = vunpack.c.l.s4 1934713408
    %v3006 = vunpack.c.0.s8 %v3005
    %v3007 = vlaneseq
    %v3008 = vshrl.u32 %v3007, 7
    %v3009 = vsub.s32 %v3006, %v3008
    %v3010 = vrot.slane %v2996, %v3009
    %v3011 = vcombine.low %v2946, %v2962
    %v3012 = vcombine.high %v2946, %v2962
    %v3014 = vunpack.c.l.s4 1934713408
    %v3015 = vunpack.c.0.s8 %v3014
    %v3016 = vlaneseq
    %v3017 = vshrl.u32 %v3016, 7
    %v3018 = vsub.s32 %v3015, %v3017
    %v3019 = vrot.slane %v3011, %v3018
    %v3021 = vunpack.c.l.s4 1934713408
    %v3022 = vunpack.c.0.s8 %v3021
    %v3023 = vlaneseq
    %v3024 = vshrl.u32 %v3023, 7
    %v3025 = vsub.s32 %v3022, %v3024
    %v3026 = vrot.slane %v3012, %v3025
    %v3027 = vcombine.low %v2971, %v2987
    %v3028 = vcombine.high %v2971, %v2987
    %v3030 = vunpack.c.l.s4 1934713408
    %v3031 = vunpack.c.0.s8 %v3030
    %v3032 = vlaneseq
    %v3033 = vshrl.u32 %v3032, 7
    %v3034 = vsub.s32 %v3031, %v3033
    %v3035 = vrot.slane %v3027, %v3034
    %v3037 = vunpack.c.l.s4 1934713408
    %v3038 = vunpack.c.0.s8 %v3037
    %v3039 = vlaneseq
    %v3040 = vshrl.u32 %v3039, 7
    %v3041 = vsub.s32 %v3038, %v3040
    %v3042 = vrot.slane %v3028, %v3041
    %v3043 = vcombine.low %v2978, %v2994
    %v3044 = vcombine.high %v2978, %v2994
    %v3046 = vunpack.c.l.s4 1934713408
    %v3047 = vunpack.c.0.s8 %v3046
    %v3048 = vlaneseq
    %v3049 = vshrl.u32 %v3048, 7
    %v3050 = vsub.s32 %v3047, %v3049
    %v3051 = vrot.slane %v3043, %v3050
    %v3053 = vunpack.c.l.s4 1934713408
    %v3054 = vunpack.c.0.s8 %v3053
    %v3055 = vlaneseq
    %v3056 = vshrl.u32 %v3055, 7
    %v3057 = vsub.s32 %v3054, %v3056
    %v3058 = vrot.slane %v3044, %v3057
    %v3059 = vcombine.low %v3003, %v3035
    %v3060 = vcombine.high %v3003, %v3035
    %v3061 = vcombine.low %v3010, %v3042
    %v3062 = vcombine.high %v3010, %v3042
    %v3063 = vcombine.low %v3019, %v3051
    %v3064 = vcombine.high %v3019, %v3051
    %v3065 = vcombine.low %v3026, %v3058
    %v3066 = vcombine.high %v3026, %v3058
    %v3067 = vcombine.low %v2071, %v2098
    %v3068 = vcombine.high %v2071, %v2098
    %v3070 = vunpack.c.l.s4 1983009808
    %v3071 = vunpack.c.0.s8 %v3070
    %v3072 = vlaneseq
    %v3073 = vshrl.u32 %v3072, 7
    %v3074 = vsub.s32 %v3071, %v3073
    %v3075 = vrot.slane %v3067, %v3074
    %v3077 = vunpack.c.l.s4 1983009808
    %v3078 = vunpack.c.0.s8 %v3077
    %v3079 = vlaneseq
    %v3080 = vshrl.u32 %v3079, 7
    %v3081 = vsub.s32 %v3078, %v3080
    %v3082 = vrot.slane %v3068, %v3081
    %v3083 = vcombine.low %v2086, %v2110
    %v3084 = vcombine.high %v2086, %v2110
    %v3086 = vunpack.c.l.s4 1983009808
    %v3087 = vunpack.c.0.s8 %v3086
    %v3088 = vlaneseq
    %v3089 = vshrl.u32 %v3088, 7
    %v3090 = vsub.s32 %v3087, %v3089
    %v3091 = vrot.slane %v3083, %v3090
    %v3093 = vunpack.c.l.s4 1983009808
    %v3094 = vunpack.c.0.s8 %v3093
    %v3095 = vlaneseq
    %v3096 = vshrl.u32 %v3095, 7
    %v3097 = vsub.s32 %v3094, %v3096
    %v3098 = vrot.slane %v3084, %v3097
    %v3099 = vcombine.low %v2122, %v2146
    %v3100 = vcombine.high %v2122, %v2146
    %v3102 = vunpack.c.l.s4 1983009808
    %v3103 = vunpack.c.0.s8 %v3102
    %v3104 = vlaneseq
    %v3105 = vshrl.u32 %v3104, 7
    %v3106 = vsub.s32 %v3103, %v3105
    %v3107 = vrot.slane %v3099, %v3106
    %v3109 = vunpack.c.l.s4 1983009808
    %v3110 = vunpack.c.0.s8 %v3109
    %v3111 = vlaneseq
    %v3112 = vshrl.u32 %v3111, 7
    %v3113 = vsub.s32 %v3110, %v3112
    %v3114 = vrot.slane %v3100, %v3113
    %v3115 = vcombine.low %v2134, %v2158
    %v3116 = vcombine.high %v2134, %v2158
    %v3118 = vunpack.c.l.s4 1983009808
    %v3119 = vunpack.c.0.s8 %v3118
    %v3120 = vlaneseq
    %v3121 = vshrl.u32 %v3120, 7
    %v3122 = vsub.s32 %v3119, %v3121
    %v3123 = vrot.slane %v3115, %v3122
    %v3125 = vunpack.c.l.s4 1983009808
    %v3126 = vunpack.c.0.s8 %v3125
    %v3127 = vlaneseq
    %v3128 = vshrl.u32 %v3127, 7
    %v3129 = vsub.s32 %v3126, %v3128
    %v3130 = vrot.slane %v3116, %v3129
    %v3131 = vcombine.low %v3075, %v3091
    %v3132 = vcombine.high %v3075, %v3091
    %v3134 = vunpack.c.l.s4 1934713408
    %v3135 = vunpack.c.0.s8 %v3134
    %v3136 = vlaneseq
    %v3137 = vshrl.u32 %v3136, 7
    %v3138 = vsub.s32 %v3135, %v3137
    %v3139 = vrot.slane %v3131, %v3138
    %v3141 = vunpack.c.l.s4 1934713408
    %v3142 = vunpack.c.0.s8 %v3141
    %v3143 = vlaneseq
    %v3144 = vshrl.u32 %v3143, 7
    %v3145 = vsub.s32 %v3142, %v3144
    %v3146 = vrot.slane %v3132, %v3145
    %v3147 = vcombine.low %v3082, %v3098
    %v3148 = vcombine.high %v3082, %v3098
    %v3150 = vunpack.c.l.s4 1934713408
    %v3151 = vunpack.c.0.s8 %v3150
    %v3152 = vlaneseq
    %v3153 = vshrl.u32 %v3152, 7
    %v3154 = vsub.s32 %v3151, %v3153
    %v3155 = vrot.slane %v3147, %v3154
    %v3157 = vunpack.c.l.s4 1934713408
    %v3158 = vunpack.c.0.s8 %v3157
    %v3159 = vlaneseq
    %v3160 = vshrl.u32 %v3159, 7
    %v3161 = vsub.s32 %v3158, %v3160
    %v3162 = vrot.slane %v3148, %v3161
    %v3163 = vcombine.low %v3107, %v3123
    %v3164 = vcombine.high %v3107, %v3123
    %v3166 = vunpack.c.l.s4 1934713408
    %v3167 = vunpack.c.0.s8 %v3166
    %v3168 = vlaneseq
    %v3169 = vshrl.u32 %v3168, 7
    %v3170 = vsub.s32 %v3167, %v3169
    %v3171 = vrot.slane %v3163, %v3170
    %v3173 = vunpack.c.l.s4 1934713408
    %v3174 = vunpack.c.0.s8 %v3173
    %v3175 = vlaneseq
    %v3176 = vshrl.u32 %v3175, 7
    %v3177 = vsub.s32 %v3174, %v3176
    %v3178 = vrot.slane %v3164, %v3177
    %v3179 = vcombine.low %v3114, %v3130
    %v3180 = vcombine.high %v3114, %v3130
    %v3182 = vunpack.c.l.s4 1934713408
    %v3183 = vunpack.c.0.s8 %v3182
    %v3184 = vlaneseq
    %v3185 = vshrl.u32 %v3184, 7
    %v3186 = vsub.s32 %v3183, %v3185
    %v3187 = vrot.slane %v3179, %v3186
    %v3189 = vunpack.c.l.s4 1934713408
    %v3190 = vunpack.c.0.s8 %v3189
    %v3191 = vlaneseq
    %v3192 = vshrl.u32 %v3191, 7
    %v3193 = vsub.s32 %v3190, %v3192
    %v3194 = vrot.slane %v3180, %v3193
    %v3195 = vcombine.low %v3139, %v3171
    %v3196 = vcombine.high %v3139, %v3171
    %v3197 = vcombine.low %v3146, %v3178
    %v3198 = vcombine.high %v3146, %v3178
    %v3199 = vcombine.low %v3155, %v3187
    %v3200 = vcombine.high %v3155, %v3187
    %v3201 = vcombine.low %v3162, %v3194
    %v3202 = vcombine.high %v3162, %v3194
    %v3203 = vcombine.low %v2073, %v2186
    %v3204 = vcombine.high %v2073, %v2186
    %v3206 = vunpack.c.l.s4 1983009808
    %v3207 = vunpack.c.0.s8 %v3206
    %v3208 = vlaneseq
    %v3209 = vshrl.u32 %v3208, 7
    %v3210 = vsub.s32 %v3207, %v3209
    %v3211 = vrot.slane %v3203, %v3210
    %v3213 = vunpack.c.l.s4 1983009808
    %v3214 = vunpack.c.0.s8 %v3213
    %v3215 = vlaneseq
    %v3216 = vshrl.u32 %v3215, 7
    %v3217 = vsub.s32 %v3214, %v3216
    %v3218 = vrot.slane %v3204, %v3217
    %v3219 = vcombine.low %v2174, %v2198
    %v3220 = vcombine.high %v2174, %v2198
    %v3222 = vunpack.c.l.s4 1983009808
    %v3223 = vunpack.c.0.s8 %v3222
    %v3224 = vlaneseq
    %v3225 = vshrl.u32 %v3224, 7
    %v3226 = vsub.s32 %v3223, %v3225
    %v3227 = vrot.slane %v3219, %v3226
    %v3229 = vunpack.c.l.s4 1983009808
    %v3230 = vunpack.c.0.s8 %v3229
    %v3231 = vlaneseq
    %v3232 = vshrl.u32 %v3231, 7
    %v3233 = vsub.s32 %v3230, %v3232
    %v3234 = vrot.slane %v3220, %v3233
    %v3235 = vcombine.low %v2210, %v2234
    %v3236 = vcombine.high %v2210, %v2234
    %v3238 = vunpack.c.l.s4 1983009808
    %v3239 = vunpack.c.0.s8 %v3238
    %v3240 = vlaneseq
    %v3241 = vshrl.u32 %v3240, 7
    %v3242 = vsub.s32 %v3239, %v3241
    %v3243 = vrot.slane %v3235, %v3242
    %v3245 = vunpack.c.l.s4 1983009808
    %v3246 = vunpack.c.0.s8 %v3245
    %v3247 = vlaneseq
    %v3248 = vshrl.u32 %v3247, 7
    %v3249 = vsub.s32 %v3246, %v3248
    %v3250 = vrot.slane %v3236, %v3249
    %v3251 = vcombine.low %v2222, %v2246
    %v3252 = vcombine.high %v2222, %v2246
    %v3254 = vunpack.c.l.s4 1983009808
    %v3255 = vunpack.c.0.s8 %v3254
    %v3256 = vlaneseq
    %v3257 = vshrl.u32 %v3256, 7
    %v3258 = vsub.s32 %v3255, %v3257
    %v3259 = vrot.slane %v3251, %v3258
    %v3261 = vunpack.c.l.s4 1983009808
    %v3262 = vunpack.c.0.s8 %v3261
    %v3263 = vlaneseq
    %v3264 = vshrl.u32 %v3263, 7
    %v3265 = vsub.s32 %v3262, %v3264
    %v3266 = vrot.slane %v3252, %v3265
    %v3267 = vcombine.low %v3211, %v3227
    %v3268 = vcombine.high %v3211, %v3227
    %v3270 = vunpack.c.l.s4 1934713408
    %v3271 = vunpack.c.0.s8 %v3270
    %v3272 = vlaneseq
    %v3273 = vshrl.u32 %v3272, 7
    %v3274 = vsub.s32 %v3271, %v3273
    %v3275 = vrot.slane %v3267, %v3274
    %v3277 = vunpack.c.l.s4 1934713408
    %v3278 = vunpack.c.0.s8 %v3277
    %v3279 = vlaneseq
    %v3280 = vshrl.u32 %v3279, 7
    %v3281 = vsub.s32 %v3278, %v3280
    %v3282 = vrot.slane %v3268, %v3281
    %v3283 = vcombine.low %v3218, %v3234
    %v3284 = vcombine.high %v3218, %v3234
    %v3286 = vunpack.c.l.s4 1934713408
    %v3287 = vunpack.c.0.s8 %v3286
    %v3288 = vlaneseq
    %v3289 = vshrl.u32 %v3288, 7
    %v3290 = vsub.s32 %v3287, %v3289
    %v3291 = vrot.slane %v3283, %v3290
    %v3293 = vunpack.c.l.s4 1934713408
    %v3294 = vunpack.c.0.s8 %v3293
    %v3295 = vlaneseq
    %v3296 = vshrl.u32 %v3295, 7
    %v3297 = vsub.s32 %v3294, %v3296
    %v3298 = vrot.slane %v3284, %v3297
    %v3299 = vcombine.low %v3243, %v3259
    %v3300 = vcombine.high %v3243, %v3259
    %v3302 = vunpack.c.l.s4 1934713408
    %v3303 = vunpack.c.0.s8 %v3302
    %v3304 = vlaneseq
    %v3305 = vshrl.u32 %v3304, 7
    %v3306 = vsub.s32 %v3303, %v3305
    %v3307 = vrot.slane %v3299, %v3306
    %v3309 = vunpack.c.l.s4 1934713408
    %v3310 = vunpack.c.0.s8 %v3309
    %v3311 = vlaneseq
    %v3312 = vshrl.u32 %v3311, 7
    %v3313 = vsub.s32 %v3310, %v3312
    %v3314 = vrot.slane %v3300, %v3313
    %v3315 = vcombine.low %v3250, %v3266
    %v3316 = vcombine.high %v3250, %v3266
    %v3318 = vunpack.c.l.s4 1934713408
    %v3319 = vunpack.c.0.s8 %v3318
    %v3320 = vlaneseq
    %v3321 = vshrl.u32 %v3320, 7
    %v3322 = vsub.s32 %v3319, %v3321
    %v3323 = vrot.slane %v3315, %v3322
    %v3325 = vunpack.c.l.s4 1934713408
    %v3326 = vunpack.c.0.s8 %v3325
    %v3327 = vlaneseq
    %v3328 = vshrl.u32 %v3327, 7
    %v3329 = vsub.s32 %v3326, %v3328
    %v3330 = vrot.slane %v3316, %v3329
    %v3331 = vcombine.low %v3275, %v3307
    %v3332 = vcombine.high %v3275, %v3307
    %v3333 = vcombine.low %v3282, %v3314
    %v3334 = vcombine.high %v3282, %v3314
    %v3335 = vcombine.low %v3291, %v3323
    %v3336 = vcombine.high %v3291, %v3323
    %v3337 = vcombine.low %v3298, %v3330
    %v3338 = vcombine.high %v3298, %v3330
    %3339 = vst.msk [vmem:[%s4] sm:$0xff] %vm77, %v2379
    %3340 = vst.msk [vmem:[%s4 + $0x8] sm:$0xff] %vm77, %v2515
    %3341 = vst.msk [vmem:[%s4 + $0x10] sm:$0xff] %vm77, %v2380
    %3342 = vst.msk [vmem:[%s4 + $0x18] sm:$0xff] %vm77, %v2516
    %3343 = vst.msk [vmem:[%s4 + $0x20] sm:$0xff] %vm77, %v2381
    %3344 = vst.msk [vmem:[%s4 + $0x28] sm:$0xff] %vm77, %v2517
    %3345 = vst.msk [vmem:[%s4 + $0x30] sm:$0xff] %vm77, %v2382
    %3346 = vst.msk [vmem:[%s4 + $0x38] sm:$0xff] %vm77, %v2518
    %3347 = vst.msk [vmem:[%s4 + $0x40] sm:$0xff] %vm77, %v2383
    %3348 = vst.msk [vmem:[%s4 + $0x48] sm:$0xff] %vm77, %v2519
    %3349 = vst.msk [vmem:[%s4 + $0x50] sm:$0xff] %vm77, %v2384
    %3350 = vst.msk [vmem:[%s4 + $0x58] sm:$0xff] %vm77, %v2520
    %3351 = vst.msk [vmem:[%s4 + $0x60] sm:$0xff] %vm77, %v2385
    %3352 = vst.msk [vmem:[%s4 + $0x68] sm:$0xff] %vm77, %v2521
    %3353 = vst.msk [vmem:[%s4 + $0x70] sm:$0xff] %vm77, %v2386
    %3354 = vst.msk [vmem:[%s4 + $0x78] sm:$0xff] %vm77, %v2522
    %3355 = vst.msk [vmem:[%s4 + $0x80] sm:$0xff] %vm77, %v2651
    %3356 = vst.msk [vmem:[%s4 + $0x88] sm:$0xff] %vm77, %v2787
    %3357 = vst.msk [vmem:[%s4 + $0x90] sm:$0xff] %vm77, %v2652
    %3358 = vst.msk [vmem:[%s4 + $0x98] sm:$0xff] %vm77, %v2788
    %3359 = vst.msk [vmem:[%s4 + $0xa0] sm:$0xff] %vm77, %v2653
    %3360 = vst.msk [vmem:[%s4 + $0xa8] sm:$0xff] %vm77, %v2789
    %3361 = vst.msk [vmem:[%s4 + $0xb0] sm:$0xff] %vm77, %v2654
    %3362 = vst.msk [vmem:[%s4 + $0xb8] sm:$0xff] %vm77, %v2790
    %3363 = vst.msk [vmem:[%s4 + $0xc0] sm:$0xff] %vm77, %v2655
    %3364 = vst.msk [vmem:[%s4 + $0xc8] sm:$0xff] %vm77, %v2791
    %3365 = vst.msk [vmem:[%s4 + $0xd0] sm:$0xff] %vm77, %v2656
    %3366 = vst.msk [vmem:[%s4 + $0xd8] sm:$0xff] %vm77, %v2792
    %3367 = vst.msk [vmem:[%s4 + $0xe0] sm:$0xff] %vm77, %v2657
    %3368 = vst.msk [vmem:[%s4 + $0xe8] sm:$0xff] %vm77, %v2793
    %3369 = vst.msk [vmem:[%s4 + $0xf0] sm:$0xff] %vm77, %v2658
    %3370 = vst.msk [vmem:[%s4 + $0xf8] sm:$0xff] %vm77, %v2794
    %3371 = vst.msk [vmem:[%s4 + $0x100] sm:$0xff] %vm77, %v2923
    %3372 = vst.msk [vmem:[%s4 + $0x108] sm:$0xff] %vm77, %v3059
    %3373 = vst.msk [vmem:[%s4 + $0x110] sm:$0xff] %vm77, %v2924
    %3374 = vst.msk [vmem:[%s4 + $0x118] sm:$0xff] %vm77, %v3060
    %3375 = vst.msk [vmem:[%s4 + $0x120] sm:$0xff] %vm77, %v2925
    %3376 = vst.msk [vmem:[%s4 + $0x128] sm:$0xff] %vm77, %v3061
    %3377 = vst.msk [vmem:[%s4 + $0x130] sm:$0xff] %vm77, %v2926
    %3378 = vst.msk [vmem:[%s4 + $0x138] sm:$0xff] %vm77, %v3062
    %3379 = vst.msk [vmem:[%s4 + $0x140] sm:$0xff] %vm77, %v2927
    %3380 = vst.msk [vmem:[%s4 + $0x148] sm:$0xff] %vm77, %v3063
    %3381 = vst.msk [vmem:[%s4 + $0x150] sm:$0xff] %vm77, %v2928
    %3382 = vst.msk [vmem:[%s4 + $0x158] sm:$0xff] %vm77, %v3064
    %3383 = vst.msk [vmem:[%s4 + $0x160] sm:$0xff] %vm77, %v2929
    %3384 = vst.msk [vmem:[%s4 + $0x168] sm:$0xff] %vm77, %v3065
    %3385 = vst.msk [vmem:[%s4 + $0x170] sm:$0xff] %vm77, %v2930
    %3386 = vst.msk [vmem:[%s4 + $0x178] sm:$0xff] %vm77, %v3066
    %3387 = vst.msk [vmem:[%s4 + $0x180] sm:$0xff] %vm77, %v3195
    %3388 = vst.msk [vmem:[%s4 + $0x188] sm:$0xff] %vm77, %v3331
    %3389 = vst.msk [vmem:[%s4 + $0x190] sm:$0xff] %vm77, %v3196
    %3390 = vst.msk [vmem:[%s4 + $0x198] sm:$0xff] %vm77, %v3332
    %3391 = vst.msk [vmem:[%s4 + $0x1a0] sm:$0xff] %vm77, %v3197
    %3392 = vst.msk [vmem:[%s4 + $0x1a8] sm:$0xff] %vm77, %v3333
    %3393 = vst.msk [vmem:[%s4 + $0x1b0] sm:$0xff] %vm77, %v3198
    %3394 = vst.msk [vmem:[%s4 + $0x1b8] sm:$0xff] %vm77, %v3334
    %3395 = vst.msk [vmem:[%s4 + $0x1c0] sm:$0xff] %vm77, %v3199
    %3396 = vst.msk [vmem:[%s4 + $0x1c8] sm:$0xff] %vm77, %v3335
    %3397 = vst.msk [vmem:[%s4 + $0x1d0] sm:$0xff] %vm77, %v3200
    %3398 = vst.msk [vmem:[%s4 + $0x1d8] sm:$0xff] %vm77, %v3336
    %3399 = vst.msk [vmem:[%s4 + $0x1e0] sm:$0xff] %vm77, %v3201
    %3400 = vst.msk [vmem:[%s4 + $0x1e8] sm:$0xff] %vm77, %v3337
    %3401 = vst.msk [vmem:[%s4 + $0x1f0] sm:$0xff] %vm77, %v3202
    %3402 = vst.msk [vmem:[%s4 + $0x1f8] sm:$0xff] %vm77, %v3338
    // Predicated region
    $region26: #{tpu_custom_call.1} parent=1 // pred_check
      _
    $region27: #{tpu_custom_call.1} parent=1 // pred_check_branch
      %3404 = sbr.rel (0) target = $region29
    $region28: #{tpu_custom_call.1} parent=1 // pred_region
      _
    $region29: #{tpu_custom_call.1} parent=1 // pred_fallthru
      _
    // Predicated region
    $region30: #{tpu_custom_call.1} parent=1 // pred_check
      _
    $region31: #{tpu_custom_call.1} parent=1 // pred_check_branch
      %3406 = sbr.rel (0) target = $region33
    $region32: #{tpu_custom_call.1} parent=1 // pred_region
      _
    $region33: #{tpu_custom_call.1} parent=1 // pred_fallthru
      _
    %3407 = vsyncpa [#allocation3], 1
    %3408 = vsyncpa [#allocation5], 1

</llo_original>
